<compile_context>
chip_gen: v7x
topology: tpu7x:2x2x1
jax: 0.10.0
libtpu: 0.0.40
codegen_flags: <defaults>
</compile_context>

<pallas_src>
import functools
import math

import jax
import jax.numpy as jnp
from jax import lax
from jax.experimental import pallas as pl
from jax.experimental.pallas import tpu as pltpu

BN_EPS = 1e-3  # matches nn.BatchNorm2d(nOut, eps=0.001)


def _round_up(x, m):
    return (x + m - 1) // m * m


def _vmem_limit_bytes():
    # v5e/v6e: 128 MiB physical VMEM, v7x: 64 MiB.  Leave headroom for the
    # compiler's own scratch; fall back conservatively if the query fails.
    try:
        cap = pltpu.get_tpu_info().vmem_capacity_bytes
    except Exception:
        cap = 128 * 1024 * 1024
    return int(min(cap * 3 // 4, 100 * 1024 * 1024))


def _choose_row_tile(oh, owp, cin, nout_pad, row_tile, vmem_limit):
    if row_tile is not None:
        return max(1, min(int(row_tile), oh))
    # bytes per flattened slab row in the pass-1 pipeline.  VMEM pads the minor
    # dim to 128 lanes, so small Cin still costs a full 128-lane tile.
    lanes_in = _round_up(cin, 128)
    per_row = 28 * lanes_in + 12 * nout_pad + 512   # ins(dbl)+taps, y(dbl)+acc, mask
    max_rows = (vmem_limit // 2) // max(per_row, 1)
    max_rows = min(max_rows, 4096)                  # bound f32 acc / step latency
    return max(1, min(oh, max_rows // owp))


# ---------------------------------------------------------------------------
# Pass 1: in-kernel im2col -> conv (+ maxpool via selector matmul) + partial BN stats
# ---------------------------------------------------------------------------
def _ds_pass1_kernel(ee_ref, eo_ref, oe_ref, oo_ref, w_ref, msk_ref,
                     y_ref, st_ref, *, use_pool, m_rows, owp):
    ee = ee_ref[0, 0]                     # ((toh+1)*owp + pad, Cin) bf16
    eo = eo_ref[0, 0]
    oe = oe_ref[0, 0]                     # (toh*owp + pad, Cin) bf16
    oo = oo_ref[0, 0]

    def tap(p, di, dj):
        # 3x3 tap at (row offset di, col offset dj) of the flattened phase slab.
        off = di * owp + dj
        return p[off:off + m_rows]        # (m_rows, Cin), static slice

    t00, t01, t02 = tap(ee, 0, 0), tap(eo, 0, 0), tap(ee, 0, 1)
    t10, t11, t12 = tap(oe, 0, 0), tap(oo, 0, 0), tap(oe, 0, 1)
    t20, t21, t22 = tap(ee, 1, 0), tap(eo, 1, 0), tap(ee, 1, 1)
    taps = (t00, t01, t02, t10, t11, t12, t20, t21, t22)

    acc = jnp.dot(t00, w_ref[0], preferred_element_type=jnp.float32)
    for k in range(1, 9):
        acc += jnp.dot(taps[k], w_ref[k], preferred_element_type=jnp.float32)

    if use_pool:
        # MaxPool2d(2,2) taps == conv taps (1,1),(1,2),(2,1),(2,2).  The 0/1
        # selector matmul scatters pool channel c into lane nConv+c, so the
        # whole (rows, nOut_pad) tile is emitted as a single dense store.
        pool = jnp.maximum(jnp.maximum(t11, t12), jnp.maximum(t21, t22))
        acc += jnp.dot(pool, w_ref[9], preferred_element_type=jnp.float32)

    y_ref[0, 0] = acc.astype(jnp.bfloat16)

    # Per-block BatchNorm partial sums (f32).  Junk flattened column (w == OW)
    # is masked; zero-padded rows/lanes already contribute zero.
    acc_m = acc * msk_ref[...]
    st_ref[0, 0] = jnp.concatenate(
        [jnp.sum(acc_m, axis=0, keepdims=True),
         jnp.sum(acc_m * acc_m, axis=0, keepdims=True)], axis=0)


# ---------------------------------------------------------------------------
# Pass 2: y * scale + shift, PReLU (scale/shift precomputed between passes)
# ---------------------------------------------------------------------------
def _ds_pass2_kernel(y_ref, pp_ref, o_ref):
    y = y_ref[0, 0].astype(jnp.float32)
    z = y * pp_ref[0:1, :] + pp_ref[1:2, :]
    o_ref[0, 0] = jnp.where(z >= 0.0, z, pp_ref[2:3, :] * z)


# ---------------------------------------------------------------------------
# Wrapper (layout glue on host; compute lives in the kernels)
# ---------------------------------------------------------------------------
def downsampling_block(x_nchw, params, nIn, nOut, *, row_tile=None):
    N, C, H, W = x_nchw.shape
    assert C == nIn
    # TODO(synk): odd H/W (conv-only branch) would need ceil-mode output sizing.
    assert H % 2 == 0 and W % 2 == 0, "even spatial dims required"
    use_pool = nIn < nOut
    nConv = nOut - nIn if use_pool else nOut
    OH, OW = H // 2, W // 2
    OWp = OW + 1                     # even-col phases carry one extra column
    nOut_pad = _round_up(nOut, 128)  # lane-dense stores; padding sliced off below
    M = N * OH * OW                  # real pixels for the BN mean

    vmem_limit = _vmem_limit_bytes()
    toh = _choose_row_tile(OH, OWp, nIn, nOut_pad, row_tile, vmem_limit)
    n_hb = -(-OH // toh)
    OH_pad = n_hb * toh
    m_rows = toh * OWp                       # matmul rows per grid block
    r_even = (toh + 1) * OWp + 8             # even-row slabs carry a halo row
    r_odd = toh * OWp + 8

    # ---- host-side layout glue: one ~1x bf16 relayout (no 9x im2col) ----
    x = jnp.transpose(x_nchw, (0, 2, 3, 1)).astype(jnp.bfloat16)     # NHWC
    x_pad = jnp.pad(x, ((0, 0), (1, 1), (1, 1), (0, 0)))
    p_ee = x_pad[:, 0::2, 0::2, :]           # (N, OH+1, OWp, Cin) each
    p_eo = x_pad[:, 0::2, 1::2, :]
    p_oe = x_pad[:, 1::2, 0::2, :]
    p_oo = x_pad[:, 1::2, 1::2, :]

    def block_even(p):                       # rows [t*toh, t*toh+toh] incl. halo
        p = jnp.pad(p, ((0, 0), (0, OH_pad - OH), (0, 0), (0, 0)))
        main = p[:, :OH_pad].reshape(N, n_hb, toh, OWp, nIn)
        halo = p[:, toh::toh][:, :, None]    # (N, n_hb, 1, OWp, Cin)
        blk = jnp.concatenate([main, halo], axis=2)
        blk = blk.reshape(N, n_hb, (toh + 1) * OWp, nIn)
        return jnp.pad(blk, ((0, 0), (0, 0), (0, r_even - (toh + 1) * OWp), (0, 0)))

    def block_odd(p):                        # rows [t*toh, (t+1)*toh)
        p = jnp.pad(p, ((0, 0), (0, max(0, OH_pad - (OH + 1))), (0, 0), (0, 0)))
        blk = p[:, :OH_pad].reshape(N, n_hb, toh * OWp, nIn)
        return jnp.pad(blk, ((0, 0), (0, 0), (0, r_odd - toh * OWp), (0, 0)))

    ee, eo = block_even(p_ee), block_even(p_eo)
    oe, oo = block_odd(p_oe), block_odd(p_oo)

    # PyTorch OIHW -> taps (9, Cin, nOut_pad); pool selector appended as tap 9.
    w = jnp.transpose(params["w"], (2, 3, 1, 0)).reshape(9, nIn, nConv)
    w = jnp.pad(w, ((0, 0), (0, 0), (0, nOut_pad - nConv)))
    if use_pool:
        sel = jnp.zeros((nIn, nOut_pad), jnp.float32)
        sel = sel.at[jnp.arange(nIn), nConv + jnp.arange(nIn)].set(1.0)
        w = jnp.concatenate([w, sel[None]], axis=0)
    w = w.astype(jnp.bfloat16)

    # Stats validity mask: flattened column OW of every output row is junk.
    col = jnp.arange(m_rows, dtype=jnp.int32) % OWp
    msk = (col < OW).astype(jnp.float32)[:, None]                    # (m_rows, 1)

    # --- pass 1: conv (+pool) + per-block partial stats; both axes parallel ---
    kernel1 = functools.partial(_ds_pass1_kernel, use_pool=use_pool,
                                m_rows=m_rows, owp=OWp)
    y_blk, stats = pl.pallas_call(
        kernel1,
        out_shape=(jax.ShapeDtypeStruct((N, n_hb, m_rows, nOut_pad), jnp.bfloat16),
                   jax.ShapeDtypeStruct((N, n_hb, 2, nOut_pad), jnp.float32)),
        grid_spec=pltpu.PrefetchScalarGridSpec(
            num_scalar_prefetch=0,
            grid=(N, n_hb),
            in_specs=[
                pl.BlockSpec((1, 1, r_even, nIn), lambda b, t: (b, t, 0, 0)),
                pl.BlockSpec((1, 1, r_even, nIn), lambda b, t: (b, t, 0, 0)),
                pl.BlockSpec((1, 1, r_odd, nIn), lambda b, t: (b, t, 0, 0)),
                pl.BlockSpec((1, 1, r_odd, nIn), lambda b, t: (b, t, 0, 0)),
                pl.BlockSpec(w.shape, lambda b, t: (0, 0, 0)),       # resident
                pl.BlockSpec((m_rows, 1), lambda b, t: (0, 0)),      # resident
            ],
            out_specs=[
                pl.BlockSpec((1, 1, m_rows, nOut_pad), lambda b, t: (b, t, 0, 0)),
                pl.BlockSpec((1, 1, 2, nOut_pad), lambda b, t: (b, t, 0, 0)),
            ]),
        compiler_params=pltpu.CompilerParams(
            dimension_semantics=("parallel", "parallel"),
            vmem_limit_bytes=vmem_limit),
    )(ee, eo, oe, oo, w, msk)

    # --- finalize BN stats + fold gamma/beta into scale/shift (tiny XLA op) ---
    ssum = jnp.sum(stats, axis=(0, 1))                               # (2, nOut_pad)
    mean = ssum[0] / M
    var = jnp.maximum(ssum[1] / M - mean * mean, 0.0)
    gamma = jnp.pad(params["gamma"].astype(jnp.float32), (0, nOut_pad - nOut),
                    constant_values=1.0)
    beta = jnp.pad(params["beta"].astype(jnp.float32), (0, nOut_pad - nOut))
    alpha = jnp.pad(params["alpha"].astype(jnp.float32), (0, nOut_pad - nOut))
    scale = gamma * lax.rsqrt(var + BN_EPS)
    shift = beta - mean * scale
    pp = jnp.stack([scale, shift, alpha])                            # (3, nOut_pad)

    # --- pass 2: affine + PReLU, dense 128-lane tiles, both axes parallel ---
    out_blk = pl.pallas_call(
        _ds_pass2_kernel,
        out_shape=jax.ShapeDtypeStruct((N, n_hb, m_rows, nOut_pad), jnp.float32),
        grid_spec=pltpu.PrefetchScalarGridSpec(
            num_scalar_prefetch=0,
            grid=(N, n_hb),
            in_specs=[
                pl.BlockSpec((1, 1, m_rows, nOut_pad), lambda b, t: (b, t, 0, 0)),
                pl.BlockSpec((3, nOut_pad), lambda b, t: (0, 0)),    # resident
            ],
            out_specs=pl.BlockSpec((1, 1, m_rows, nOut_pad),
                                   lambda b, t: (b, t, 0, 0))),
        compiler_params=pltpu.CompilerParams(
            dimension_semantics=("parallel", "parallel"),
            vmem_limit_bytes=vmem_limit),
    )(y_blk, pp)

    out = out_blk.reshape(N, n_hb, toh, OWp, nOut_pad)[:, :, :, :OW, :nOut]
    out = out.reshape(N, OH_pad, OW, nOut)[:, :OH]
    return jnp.transpose(out, (0, 3, 1, 2))                          # NCHW


# ---------------------------------------------------------------------------
# Pure-JAX reference (f32) for correctness check
# ---------------------------------------------------------------------------
def downsampling_block_ref(x, params, nIn, nOut):
    conv = lax.conv_general_dilated(
        x, params["w"], window_strides=(2, 2), padding=((1, 1), (1, 1)),
        dimension_numbers=("NCHW", "OIHW", "NCHW"))
    if nIn < nOut:
        pool = lax.reduce_window(x, -jnp.inf, lax.max,
                                 (1, 1, 2, 2), (1, 1, 2, 2), "VALID")
        y = jnp.concatenate([conv, pool], axis=1)
    else:
        y = conv
    mean = jnp.mean(y, axis=(0, 2, 3), keepdims=True)
    var = jnp.mean((y - mean) ** 2, axis=(0, 2, 3), keepdims=True)
    y_hat = (y - mean) * lax.rsqrt(var + BN_EPS)
    z = params["gamma"][None, :, None, None] * y_hat + \
        params["beta"][None, :, None, None]
    a = params["alpha"][None, :, None, None]
    return jnp.where(z >= 0.0, z, a * z)


def init_params(key, nIn, nOut):
    nConv = nOut - nIn if nIn < nOut else nOut
    k1, k2, k3, k4 = jax.random.split(key, 4)
    fan_in = nIn * 9
    bound = 1.0 / math.sqrt(fan_in)
    return {
        "w": jax.random.uniform(k1, (nConv, nIn, 3, 3), jnp.float32,
                                -bound, bound),
        "gamma": 1.0 + 0.1 * jax.random.normal(k2, (nOut,), jnp.float32),
        "beta": 0.1 * jax.random.normal(k3, (nOut,), jnp.float32),
        "alpha": jnp.full((nOut,), 0.25, jnp.float32) +
                 0.05 * jax.random.normal(k4, (nOut,), jnp.float32),
    }


if __name__ == "__main__":
    key = jax.random.PRNGKey(0)

    # Branch 1: nIn < nOut (conv3x3 stride-2 || maxpool concat).  row_tile=3 ->
    # 3 row-blocks with one padded output row: exercises the halo row, the
    # row padding, and the multi-block partial-stats reduction.
    nIn, nOut = 4, 8
    N, H, W = 2, 16, 16
    kx, kp, key = jax.random.split(key, 3)
    x = jax.random.normal(kx, (N, nIn, H, W), jnp.float32)
    params = init_params(kp, nIn, nOut)
    out = jax.block_until_ready(downsampling_block(x, params, nIn, nOut, row_tile=3))
    ref = jax.block_until_ready(downsampling_block_ref(x, params, nIn, nOut))
    assert out.shape == (N, nOut, H // 2, W // 2), out.shape
    max_err = float(jnp.max(jnp.abs(out - ref)))
    mean_err = float(jnp.mean(jnp.abs(out - ref)))
    # bf16 input stream + bf16 intermediate y -> looser tolerance than pure f32.
    assert max_err < 0.12, max_err
    assert mean_err < 2e-2, mean_err

    # Branch 2: nIn >= nOut (conv only, no pool concat), auto row tile.
    nIn2, nOut2 = 8, 8
    kx2, kp2, key = jax.random.split(key, 3)
    x2 = jax.random.normal(kx2, (N, nIn2, H, W), jnp.float32)
    params2 = init_params(kp2, nIn2, nOut2)
    out2 = jax.block_until_ready(downsampling_block(x2, params2, nIn2, nOut2))
    ref2 = jax.block_until_ready(downsampling_block_ref(x2, params2, nIn2, nOut2))
    assert out2.shape == (N, nOut2, H // 2, W // 2), out2.shape
    max_err2 = float(jnp.max(jnp.abs(out2 - ref2)))
    assert max_err2 < 0.12, max_err2

    print("KERNEL_OK")
</pallas_src>

<mosaic_0001>
module attributes {stable_mosaic.version = 11 : i64} {
  func.func @_ds_pass1_kernel(%arg0: i32, %arg1: i32, %arg2: memref<1x1x44x4xbf16, #tpu.memory_space<vmem>>, %arg3: memref<1x1x44x4xbf16, #tpu.memory_space<vmem>>, %arg4: memref<1x1x35x4xbf16, #tpu.memory_space<vmem>>, %arg5: memref<1x1x35x4xbf16, #tpu.memory_space<vmem>>, %arg6: memref<10x4x128xbf16, #tpu.memory_space<vmem>>, %arg7: memref<27x1xf32, #tpu.memory_space<vmem>>, %arg8: memref<1x1x27x128xbf16, #tpu.memory_space<vmem>>, %arg9: memref<1x1x2x128xf32, #tpu.memory_space<vmem>>) attributes {dimension_semantics = [#tpu.dimension_semantics<parallel>, #tpu.dimension_semantics<parallel>], iteration_bounds = array<i64: 2, 3>, scalar_prefetch = 0 : i64, scratch_operands = 0 : i64, tpu.core_type = #tpu.core_type<tc>, window_params = [{transform_indices = @transform_0, window_bounds = array<i64: 1, 1, 44, 4>}, {transform_indices = @transform_1, window_bounds = array<i64: 1, 1, 44, 4>}, {transform_indices = @transform_2, window_bounds = array<i64: 1, 1, 35, 4>}, {transform_indices = @transform_3, window_bounds = array<i64: 1, 1, 35, 4>}, {pipeline_mode = #tpu.pipeline_mode<synchronous>, transform_indices = @transform_4, window_bounds = array<i64: 10, 4, 128>}, {pipeline_mode = #tpu.pipeline_mode<synchronous>, transform_indices = @transform_5, window_bounds = array<i64: 27, 1>}, {transform_indices = @transform_6, window_bounds = array<i64: 1, 1, 27, 128>}, {transform_indices = @transform_7, window_bounds = array<i64: 1, 1, 2, 128>}]} {
    %c0 = arith.constant 0 : index
    %c0_0 = arith.constant 0 : index
    %c0_1 = arith.constant 0 : index
    %c0_2 = arith.constant 0 : index
    %0 = vector.load %arg2[%c0, %c0_0, %c0_1, %c0_2] : memref<1x1x44x4xbf16, #tpu.memory_space<vmem>>, vector<1x1x44x4xbf16>
    %1 = vector.shape_cast %0 : vector<1x1x44x4xbf16> to vector<44x4xbf16>
    %c0_3 = arith.constant 0 : index
    %c0_4 = arith.constant 0 : index
    %c0_5 = arith.constant 0 : index
    %c0_6 = arith.constant 0 : index
    %2 = vector.load %arg3[%c0_3, %c0_4, %c0_5, %c0_6] : memref<1x1x44x4xbf16, #tpu.memory_space<vmem>>, vector<1x1x44x4xbf16>
    %3 = vector.shape_cast %2 : vector<1x1x44x4xbf16> to vector<44x4xbf16>
    %c0_7 = arith.constant 0 : index
    %c0_8 = arith.constant 0 : index
    %c0_9 = arith.constant 0 : index
    %c0_10 = arith.constant 0 : index
    %4 = vector.load %arg4[%c0_7, %c0_8, %c0_9, %c0_10] : memref<1x1x35x4xbf16, #tpu.memory_space<vmem>>, vector<1x1x35x4xbf16>
    %5 = vector.shape_cast %4 : vector<1x1x35x4xbf16> to vector<35x4xbf16>
    %c0_11 = arith.constant 0 : index
    %c0_12 = arith.constant 0 : index
    %c0_13 = arith.constant 0 : index
    %c0_14 = arith.constant 0 : index
    %6 = vector.load %arg5[%c0_11, %c0_12, %c0_13, %c0_14] : memref<1x1x35x4xbf16, #tpu.memory_space<vmem>>, vector<1x1x35x4xbf16>
    %7 = vector.shape_cast %6 : vector<1x1x35x4xbf16> to vector<35x4xbf16>
    %8 = vector.extract_strided_slice %1 {offsets = [0, 0], sizes = [27, 4], strides = [1, 1]} : vector<44x4xbf16> to vector<27x4xbf16>
    %9 = vector.extract_strided_slice %3 {offsets = [0, 0], sizes = [27, 4], strides = [1, 1]} : vector<44x4xbf16> to vector<27x4xbf16>
    %10 = vector.extract_strided_slice %1 {offsets = [1, 0], sizes = [27, 4], strides = [1, 1]} : vector<44x4xbf16> to vector<27x4xbf16>
    %11 = vector.extract_strided_slice %5 {offsets = [0, 0], sizes = [27, 4], strides = [1, 1]} : vector<35x4xbf16> to vector<27x4xbf16>
    %12 = vector.extract_strided_slice %7 {offsets = [0, 0], sizes = [27, 4], strides = [1, 1]} : vector<35x4xbf16> to vector<27x4xbf16>
    %13 = vector.extract_strided_slice %5 {offsets = [1, 0], sizes = [27, 4], strides = [1, 1]} : vector<35x4xbf16> to vector<27x4xbf16>
    %14 = vector.extract_strided_slice %1 {offsets = [9, 0], sizes = [27, 4], strides = [1, 1]} : vector<44x4xbf16> to vector<27x4xbf16>
    %15 = vector.extract_strided_slice %3 {offsets = [9, 0], sizes = [27, 4], strides = [1, 1]} : vector<44x4xbf16> to vector<27x4xbf16>
    %16 = vector.extract_strided_slice %1 {offsets = [10, 0], sizes = [27, 4], strides = [1, 1]} : vector<44x4xbf16> to vector<27x4xbf16>
    %c0_15 = arith.constant 0 : index
    %c0_16 = arith.constant 0 : index
    %c0_17 = arith.constant 0 : index
    %17 = vector.load %arg6[%c0_15, %c0_16, %c0_17] : memref<10x4x128xbf16, #tpu.memory_space<vmem>>, vector<1x4x128xbf16>
    %18 = vector.shape_cast %17 : vector<1x4x128xbf16> to vector<4x128xbf16>
    %cst = arith.constant dense<0.000000e+00> : vector<27x128xf32>
    %19 = tpu.matmul %8, %18, %cst {dimension_numbers = #tpu.dot_dimension_numbers<[1], [0], [0], [1], [0, 0, 1, 1], [], []>} : vector<27x4xbf16>, vector<4x128xbf16>, vector<27x128xf32> -> vector<27x128xf32>
    %c1 = arith.constant 1 : index
    %c0_18 = arith.constant 0 : index
    %c0_19 = arith.constant 0 : index
    %20 = vector.load %arg6[%c1, %c0_18, %c0_19] : memref<10x4x128xbf16, #tpu.memory_space<vmem>>, vector<1x4x128xbf16>
    %21 = vector.shape_cast %20 : vector<1x4x128xbf16> to vector<4x128xbf16>
    %cst_20 = arith.constant dense<0.000000e+00> : vector<27x128xf32>
    %22 = tpu.matmul %9, %21, %cst_20 {dimension_numbers = #tpu.dot_dimension_numbers<[1], [0], [0], [1], [0, 0, 1, 1], [], []>} : vector<27x4xbf16>, vector<4x128xbf16>, vector<27x128xf32> -> vector<27x128xf32>
    %23 = arith.addf %19, %22 : vector<27x128xf32>
    %c2 = arith.constant 2 : index
    %c0_21 = arith.constant 0 : index
    %c0_22 = arith.constant 0 : index
    %24 = vector.load %arg6[%c2, %c0_21, %c0_22] : memref<10x4x128xbf16, #tpu.memory_space<vmem>>, vector<1x4x128xbf16>
    %25 = vector.shape_cast %24 : vector<1x4x128xbf16> to vector<4x128xbf16>
    %cst_23 = arith.constant dense<0.000000e+00> : vector<27x128xf32>
    %26 = tpu.matmul %10, %25, %cst_23 {dimension_numbers = #tpu.dot_dimension_numbers<[1], [0], [0], [1], [0, 0, 1, 1], [], []>} : vector<27x4xbf16>, vector<4x128xbf16>, vector<27x128xf32> -> vector<27x128xf32>
    %27 = arith.addf %23, %26 : vector<27x128xf32>
    %c3 = arith.constant 3 : index
    %c0_24 = arith.constant 0 : index
    %c0_25 = arith.constant 0 : index
    %28 = vector.load %arg6[%c3, %c0_24, %c0_25] : memref<10x4x128xbf16, #tpu.memory_space<vmem>>, vector<1x4x128xbf16>
    %29 = vector.shape_cast %28 : vector<1x4x128xbf16> to vector<4x128xbf16>
    %cst_26 = arith.constant dense<0.000000e+00> : vector<27x128xf32>
    %30 = tpu.matmul %11, %29, %cst_26 {dimension_numbers = #tpu.dot_dimension_numbers<[1], [0], [0], [1], [0, 0, 1, 1], [], []>} : vector<27x4xbf16>, vector<4x128xbf16>, vector<27x128xf32> -> vector<27x128xf32>
    %31 = arith.addf %27, %30 : vector<27x128xf32>
    %c4 = arith.constant 4 : index
    %c0_27 = arith.constant 0 : index
    %c0_28 = arith.constant 0 : index
    %32 = vector.load %arg6[%c4, %c0_27, %c0_28] : memref<10x4x128xbf16, #tpu.memory_space<vmem>>, vector<1x4x128xbf16>
    %33 = vector.shape_cast %32 : vector<1x4x128xbf16> to vector<4x128xbf16>
    %cst_29 = arith.constant dense<0.000000e+00> : vector<27x128xf32>
    %34 = tpu.matmul %12, %33, %cst_29 {dimension_numbers = #tpu.dot_dimension_numbers<[1], [0], [0], [1], [0, 0, 1, 1], [], []>} : vector<27x4xbf16>, vector<4x128xbf16>, vector<27x128xf32> -> vector<27x128xf32>
    %35 = arith.addf %31, %34 : vector<27x128xf32>
    %c5 = arith.constant 5 : index
    %c0_30 = arith.constant 0 : index
    %c0_31 = arith.constant 0 : index
    %36 = vector.load %arg6[%c5, %c0_30, %c0_31] : memref<10x4x128xbf16, #tpu.memory_space<vmem>>, vector<1x4x128xbf16>
    %37 = vector.shape_cast %36 : vector<1x4x128xbf16> to vector<4x128xbf16>
    %cst_32 = arith.constant dense<0.000000e+00> : vector<27x128xf32>
    %38 = tpu.matmul %13, %37, %cst_32 {dimension_numbers = #tpu.dot_dimension_numbers<[1], [0], [0], [1], [0, 0, 1, 1], [], []>} : vector<27x4xbf16>, vector<4x128xbf16>, vector<27x128xf32> -> vector<27x128xf32>
    %39 = arith.addf %35, %38 : vector<27x128xf32>
    %c6 = arith.constant 6 : index
    %c0_33 = arith.constant 0 : index
    %c0_34 = arith.constant 0 : index
    %40 = vector.load %arg6[%c6, %c0_33, %c0_34] : memref<10x4x128xbf16, #tpu.memory_space<vmem>>, vector<1x4x128xbf16>
    %41 = vector.shape_cast %40 : vector<1x4x128xbf16> to vector<4x128xbf16>
    %cst_35 = arith.constant dense<0.000000e+00> : vector<27x128xf32>
    %42 = tpu.matmul %14, %41, %cst_35 {dimension_numbers = #tpu.dot_dimension_numbers<[1], [0], [0], [1], [0, 0, 1, 1], [], []>} : vector<27x4xbf16>, vector<4x128xbf16>, vector<27x128xf32> -> vector<27x128xf32>
    %43 = arith.addf %39, %42 : vector<27x128xf32>
    %c7 = arith.constant 7 : index
    %c0_36 = arith.constant 0 : index
    %c0_37 = arith.constant 0 : index
    %44 = vector.load %arg6[%c7, %c0_36, %c0_37] : memref<10x4x128xbf16, #tpu.memory_space<vmem>>, vector<1x4x128xbf16>
    %45 = vector.shape_cast %44 : vector<1x4x128xbf16> to vector<4x128xbf16>
    %cst_38 = arith.constant dense<0.000000e+00> : vector<27x128xf32>
    %46 = tpu.matmul %15, %45, %cst_38 {dimension_numbers = #tpu.dot_dimension_numbers<[1], [0], [0], [1], [0, 0, 1, 1], [], []>} : vector<27x4xbf16>, vector<4x128xbf16>, vector<27x128xf32> -> vector<27x128xf32>
    %47 = arith.addf %43, %46 : vector<27x128xf32>
    %c8 = arith.constant 8 : index
    %c0_39 = arith.constant 0 : index
    %c0_40 = arith.constant 0 : index
    %48 = vector.load %arg6[%c8, %c0_39, %c0_40] : memref<10x4x128xbf16, #tpu.memory_space<vmem>>, vector<1x4x128xbf16>
    %49 = vector.shape_cast %48 : vector<1x4x128xbf16> to vector<4x128xbf16>
    %cst_41 = arith.constant dense<0.000000e+00> : vector<27x128xf32>
    %50 = tpu.matmul %16, %49, %cst_41 {dimension_numbers = #tpu.dot_dimension_numbers<[1], [0], [0], [1], [0, 0, 1, 1], [], []>} : vector<27x4xbf16>, vector<4x128xbf16>, vector<27x128xf32> -> vector<27x128xf32>
    %51 = arith.addf %47, %50 : vector<27x128xf32>
    %52 = arith.maximumf %12, %13 : vector<27x4xbf16>
    %53 = arith.maximumf %15, %16 : vector<27x4xbf16>
    %54 = arith.maximumf %52, %53 : vector<27x4xbf16>
    %c9 = arith.constant 9 : index
    %c0_42 = arith.constant 0 : index
    %c0_43 = arith.constant 0 : index
    %55 = vector.load %arg6[%c9, %c0_42, %c0_43] : memref<10x4x128xbf16, #tpu.memory_space<vmem>>, vector<1x4x128xbf16>
    %56 = vector.shape_cast %55 : vector<1x4x128xbf16> to vector<4x128xbf16>
    %cst_44 = arith.constant dense<0.000000e+00> : vector<27x128xf32>
    %57 = tpu.matmul %54, %56, %cst_44 {dimension_numbers = #tpu.dot_dimension_numbers<[1], [0], [0], [1], [0, 0, 1, 1], [], []>} : vector<27x4xbf16>, vector<4x128xbf16>, vector<27x128xf32> -> vector<27x128xf32>
    %58 = arith.addf %51, %57 : vector<27x128xf32>
    %59 = arith.truncf %58 : vector<27x128xf32> to vector<27x128xbf16>
    %c0_45 = arith.constant 0 : index
    %c0_46 = arith.constant 0 : index
    %c0_47 = arith.constant 0 : index
    %c0_48 = arith.constant 0 : index
    %60 = vector.load %arg8[%c0_45, %c0_46, %c0_47, %c0_48] : memref<1x1x27x128xbf16, #tpu.memory_space<vmem>>, vector<1x1x27x128xbf16>
    %61 = vector.shape_cast %60 : vector<1x1x27x128xbf16> to vector<27x128xbf16>
    %62 = vector.shape_cast %59 : vector<27x128xbf16> to vector<1x1x27x128xbf16>
    tpu.vector_store %arg8[%c0_45, %c0_46, %c0_47, %c0_48], %62 {strides = array<i32>} : memref<1x1x27x128xbf16, #tpu.memory_space<vmem>>, vector<1x1x27x128xbf16>,
    %c0_49 = arith.constant 0 : index
    %c0_50 = arith.constant 0 : index
    %63 = vector.load %arg7[%c0_49, %c0_50] : memref<27x1xf32, #tpu.memory_space<vmem>>, vector<27x1xf32>
    %64 = vector.broadcast %63 : vector<27x1xf32> to vector<27x128xf32>
    %65 = arith.mulf %58, %64 : vector<27x128xf32>
    %cst_51 = arith.constant dense<0.000000e+00> : vector<128xf32>
    %66 = vector.multi_reduction <add>, %65, %cst_51 [0] : vector<27x128xf32> to vector<128xf32>
    %67 = vector.shape_cast %66 : vector<128xf32> to vector<1x128xf32>
    %68 = arith.mulf %65, %65 : vector<27x128xf32>
    %cst_52 = arith.constant dense<0.000000e+00> : vector<128xf32>
    %69 = vector.multi_reduction <add>, %68, %cst_52 [0] : vector<27x128xf32> to vector<128xf32>
    %70 = vector.shape_cast %69 : vector<128xf32> to vector<1x128xf32>
    %71 = tpu.concatenate %67, %70 in 0 : vector<1x128xf32>, vector<1x128xf32> -> vector<2x128xf32>
    %c0_53 = arith.constant 0 : index
    %c0_54 = arith.constant 0 : index
    %c0_55 = arith.constant 0 : index
    %c0_56 = arith.constant 0 : index
    %72 = vector.load %arg9[%c0_53, %c0_54, %c0_55, %c0_56] : memref<1x1x2x128xf32, #tpu.memory_space<vmem>>, vector<1x1x2x128xf32>
    %73 = vector.shape_cast %72 : vector<1x1x2x128xf32> to vector<2x128xf32>
    %74 = vector.shape_cast %71 : vector<2x128xf32> to vector<1x1x2x128xf32>
    tpu.vector_store %arg9[%c0_53, %c0_54, %c0_55, %c0_56], %74 {strides = array<i32>} : memref<1x1x2x128xf32, #tpu.memory_space<vmem>>, vector<1x1x2x128xf32>,
    return
  }
  func.func @transform_0(%arg0: i32, %arg1: i32) -> (i32, i32, i32, i32) {
    %c0_i32 = arith.constant 0 : i32
    %c0_i32_0 = arith.constant 0 : i32
    %c0_i32_1 = arith.constant 0 : i32
    return %arg0, %arg1, %c0_i32, %c0_i32_0 : i32, i32, i32, i32
  }
  func.func @transform_1(%arg0: i32, %arg1: i32) -> (i32, i32, i32, i32) {
    %c0_i32 = arith.constant 0 : i32
    %c0_i32_0 = arith.constant 0 : i32
    %c0_i32_1 = arith.constant 0 : i32
    return %arg0, %arg1, %c0_i32, %c0_i32_0 : i32, i32, i32, i32
  }
  func.func @transform_2(%arg0: i32, %arg1: i32) -> (i32, i32, i32, i32) {
    %c0_i32 = arith.constant 0 : i32
    %c0_i32_0 = arith.constant 0 : i32
    %c0_i32_1 = arith.constant 0 : i32
    return %arg0, %arg1, %c0_i32, %c0_i32_0 : i32, i32, i32, i32
  }
  func.func @transform_3(%arg0: i32, %arg1: i32) -> (i32, i32, i32, i32) {
    %c0_i32 = arith.constant 0 : i32
    %c0_i32_0 = arith.constant 0 : i32
    %c0_i32_1 = arith.constant 0 : i32
    return %arg0, %arg1, %c0_i32, %c0_i32_0 : i32, i32, i32, i32
  }
  func.func @transform_4(%arg0: i32, %arg1: i32) -> (i32, i32, i32) {
    %c0_i32 = arith.constant 0 : i32
    %c0_i32_0 = arith.constant 0 : i32
    %c0_i32_1 = arith.constant 0 : i32
    %c0_i32_2 = arith.constant 0 : i32
    return %c0_i32, %c0_i32_0, %c0_i32_1 : i32, i32, i32
  }
  func.func @transform_5(%arg0: i32, %arg1: i32) -> (i32, i32) {
    %c0_i32 = arith.constant 0 : i32
    %c0_i32_0 = arith.constant 0 : i32
    %c0_i32_1 = arith.constant 0 : i32
    return %c0_i32, %c0_i32_0 : i32, i32
  }
  func.func @transform_6(%arg0: i32, %arg1: i32) -> (i32, i32, i32, i32) {
    %c0_i32 = arith.constant 0 : i32
    %c0_i32_0 = arith.constant 0 : i32
    %c0_i32_1 = arith.constant 0 : i32
    return %arg0, %arg1, %c0_i32, %c0_i32_0 : i32, i32, i32, i32
  }
  func.func @transform_7(%arg0: i32, %arg1: i32) -> (i32, i32, i32, i32) {
    %c0_i32 = arith.constant 0 : i32
    %c0_i32_0 = arith.constant 0 : i32
    %c0_i32_1 = arith.constant 0 : i32
    return %arg0, %arg1, %c0_i32, %c0_i32_0 : i32, i32, i32, i32
  }
}

</mosaic_0001>

<llo_original>
// kernel: tpu_custom_call.1
$region0: #{tpu_custom_call.1}
  #allocation0 [shape = 'u32[]', space=smem, size = 0x4, offset = 0x4, fixed_abs, tag = 'smem constant byte address 0x4 - core index']
  #allocation1 [shape = 'u32[144,128]{1,0:T(1,128)}', space=vmem, size = 0x12000, scoped, tag = 'internal scratch']
  %s0 = inlined_call_operand.hbm [shape: bf16[2,3,44,4], index: 0, kind: input, shape index: {}]
  %s1 = inlined_call_operand.hbm [shape: bf16[2,3,44,4], index: 1, kind: input, shape index: {}]
  %s2 = inlined_call_operand.hbm [shape: bf16[2,3,35,4], index: 2, kind: input, shape index: {}]
  %s3 = inlined_call_operand.hbm [shape: bf16[2,3,35,4], index: 3, kind: input, shape index: {}]
  %s4 = inlined_call_operand.hbm [shape: bf16[10,4,128], index: 4, kind: input, shape index: {}]
  %s5 = inlined_call_operand.hbm [shape: f32[27,1], index: 5, kind: input, shape index: {}]
  %s6 = inlined_call_operand.hbm [shape: bf16[2,3,27,128], index: 6, kind: output, shape index: {0}]
  %s7 = inlined_call_operand.hbm [shape: f32[2,3,2,128], index: 7, kind: output, shape index: {1}]
  %8 = xla_tuple %s6, %s7
  %s9 = sld [smem:[#allocation0]]
  $region89: #{tpu_custom_call.1} parent=0
    _
  %s11 = ssub.s32 1, %s9
  %s12 = scalar_select 0, %s11, %s9
  $region1: #{tpu_custom_call.1} parent=0
    #allocation2 [shape = 'u8[24576]{0}', space=vmem, size = 0x6000, scoped, tag = 'input window, operand 0']
    #allocation3 [shape = 's32[2]{0}', space=sflag, size = 0x8, scoped, tag = 'scoped memory for tpu_custom_call.1']
    #allocation4 [shape = 's32[2]{0}', space=sflag, size = 0x8, scoped, tag = 'scoped memory for tpu_custom_call.1']
    #allocation5 [shape = 'u8[24576]{0}', space=vmem, size = 0x6000, scoped, tag = 'input window, operand 1']
    #allocation6 [shape = 's32[2]{0}', space=sflag, size = 0x8, scoped, tag = 'scoped memory for tpu_custom_call.1']
    #allocation7 [shape = 'u8[20480]{0}', space=vmem, size = 0x5000, scoped, tag = 'input window, operand 2']
    #allocation8 [shape = 'u8[20480]{0}', space=vmem, size = 0x5000, scoped, tag = 'input window, operand 3']
    #allocation9 [shape = 's32[2]{0}', space=sflag, size = 0x8, scoped, tag = 'scoped memory for tpu_custom_call.1']
    #allocation10 [shape = 'u8[10240]{0}', space=vmem, size = 0x2800, scoped, tag = 'input window, operand 4, single buffered']
    #allocation11 [shape = 'u8[16384]{0}', space=vmem, size = 0x4000, scoped, tag = 'input window, operand 5, single buffered']
    #allocation12 [shape = 's32[1]{0}', space=sflag, size = 0x4, scoped, tag = 'scoped memory for tpu_custom_call.1']
    #allocation13 [shape = 'u8[16384]{0}', space=vmem, size = 0x4000, scoped, tag = 'output window, operand 0']
    #allocation14 [shape = 'u8[2048]{0}', space=vmem, size = 0x800, scoped, tag = 'output window, operand 1']
    #allocation15 [shape = 's32[2]{0}', space=sflag, size = 0x8, scoped, tag = 'scoped memory for tpu_custom_call.1']
    %13 = vsyncpa [#allocation3], 0
    %s14 = scalar_lea.sflag [#allocation3], 1
    %15 = vsyncpa %s14, 0
    %16 = vsyncpa [#allocation6], 0
    %s17 = scalar_lea.sflag [#allocation6], 1
    %18 = vsyncpa %s17, 0
    %19 = vsyncpa [#allocation9], 0
    %s20 = scalar_lea.sflag [#allocation9], 1
    %21 = vsyncpa %s20, 0
    %22 = vsyncpa [#allocation12], 0
    %23 = vsyncpa [#allocation4], 0
    %s24 = scalar_lea.sflag [#allocation4], 1
    %25 = vsyncpa %s24, 0
    %26 = vsyncpa [#allocation15], 0
    %s27 = scalar_lea.sflag [#allocation15], 1
    %28 = vsyncpa %s27, 0
    loop: start=0, step=1, limit=8
    $region2: #{tpu_custom_call.1} parent=1 // loop_pre_header
      _
    $region3: #{tpu_custom_call.1} parent=1 // loop_header
      %s30 = sphi 0, %s34
      %p31 = scmp.ge.s32.totalorder %s30, 8
      %s37 = sphi 0, %s49
      %s38 = sphi 0, %s45
      %s39 = sphi 0, %s37
      %s40 = sphi 0, %s38
      %s41 = sphi 0, %s39
      %s42 = sphi 0, %s40
      %s54 = sphi 0, %s56
      %s57 = sphi 0, %s54
      %s58 = sphi 0, %s57
      %s74 = sphi 0, %s58
      %s82 = sphi 0, %s84
      %s85 = sphi 0, %s82
      %s86 = sphi 0, %s85
      %s102 = sphi 0, %s86
      %s110 = sphi 0, %s112
      %s113 = sphi 0, %s110
      %s114 = sphi 0, %s113
      %s130 = sphi 0, %s114
      %s138 = sphi 0, %s140
      %s141 = sphi 0, %s138
      %s142 = sphi 0, %s141
      %s158 = sphi 0, %s142
      %s162 = sphi 0, %s162
      %s164 = sphi 0, %s162
      %s165 = sphi 0, %s164
      %s179 = sphi 0, %s165
      %s183 = sphi 0, %s183
      %s185 = sphi 0, %s183
      %s186 = sphi 0, %s185
      %s200 = sphi 0, %s186
      %s208 = sphi 0, %s210
      %s211 = sphi 0, %s208
      %s212 = sphi 0, %s211
      %s228 = sphi 0, %s212
      %s236 = sphi 0, %s238
      %s239 = sphi 0, %s236
      %s240 = sphi 0, %s239
      %s256 = sphi 0, %s240
    $region4: #{tpu_custom_call.1} parent=1 // loop_header_branch
      %33 = sbr.rel (%p31) target = $region8
    $region5: #{tpu_custom_call.1} parent=1 // loop_body
      %s35 = ssub.s32 %s30, 1
      %s36 = ssub.s32 %s30, 2
      %s43 = sadd.s32 1, %s38
      %p44 = scmp.ge.s32.totalorder %s43, 3
      %s45 = scalar_select %p44, 0, %s43
      %s46 = sadd.s32 1, %s37
      %s47 = scalar_select %p44, %s46, %s37
      %p48 = scmp.ge.s32.totalorder %s47, 2
      %s49 = scalar_select %p48, 0, %s47
      %s50 = ssub.s32 %s37, %s49
      %s51 = ssub.s32 %s38, %s45
      %s52 = sor.u32 %s50, %s51
      %p53 = scmp.eq.s32.totalorder %s52, 0
      %s55 = sadd.s32 %s54, 1
      %s56 = scalar_select %p53, %s54, %s55
      %p59 = pneg %p53
      %p60 = scmp.eq.s32.totalorder %s30, 5
      %p61 = por %p59, %p60
      %p62 = scmp.ne.s32.totalorder %s54, %s57
      %p63 = scmp.eq.s32.totalorder %s30, 0
      %p64 = por %p62, %p63
      %p65 = scmp.ne.s32.totalorder %s54, %s57
      %p66 = scmp.eq.s32.totalorder %s35, 5
      %p67 = por %p65, %p66
      %p68 = scmp.ne.s32.totalorder %s57, %s58
      %p69 = scmp.eq.s32.totalorder %s35, 0
      %p70 = por %p68, %p69
      %p71 = scmp.ne.s32.totalorder %s57, %s58
      %p72 = scmp.eq.s32.totalorder %s36, 5
      %p73 = por %p71, %p72
      %p75 = scmp.ne.s32.totalorder %s58, %s74
      %p76 = scmp.eq.s32.totalorder %s36, 0
      %p77 = por %p75, %p76
      %s78 = ssub.s32 %s37, %s49
      %s79 = ssub.s32 %s38, %s45
      %s80 = sor.u32 %s78, %s79
      %p81 = scmp.eq.s32.totalorder %s80, 0
      %s83 = sadd.s32 %s82, 1
      %s84 = scalar_select %p81, %s82, %s83
      %p87 = pneg %p81
      %p88 = scmp.eq.s32.totalorder %s30, 5
      %p89 = por %p87, %p88
      %p90 = scmp.ne.s32.totalorder %s82, %s85
      %p91 = scmp.eq.s32.totalorder %s30, 0
      %p92 = por %p90, %p91
      %p93 = scmp.ne.s32.totalorder %s82, %s85
      %p94 = scmp.eq.s32.totalorder %s35, 5
      %p95 = por %p93, %p94
      %p96 = scmp.ne.s32.totalorder %s85, %s86
      %p97 = scmp.eq.s32.totalorder %s35, 0
      %p98 = por %p96, %p97
      %p99 = scmp.ne.s32.totalorder %s85, %s86
      %p100 = scmp.eq.s32.totalorder %s36, 5
      %p101 = por %p99, %p100
      %p103 = scmp.ne.s32.totalorder %s86, %s102
      %p104 = scmp.eq.s32.totalorder %s36, 0
      %p105 = por %p103, %p104
      %s106 = ssub.s32 %s37, %s49
      %s107 = ssub.s32 %s38, %s45
      %s108 = sor.u32 %s106, %s107
      %p109 = scmp.eq.s32.totalorder %s108, 0
      %s111 = sadd.s32 %s110, 1
      %s112 = scalar_select %p109, %s110, %s111
      %p115 = pneg %p109
      %p116 = scmp.eq.s32.totalorder %s30, 5
      %p117 = por %p115, %p116
      %p118 = scmp.ne.s32.totalorder %s110, %s113
      %p119 = scmp.eq.s32.totalorder %s30, 0
      %p120 = por %p118, %p119
      %p121 = scmp.ne.s32.totalorder %s110, %s113
      %p122 = scmp.eq.s32.totalorder %s35, 5
      %p123 = por %p121, %p122
      %p124 = scmp.ne.s32.totalorder %s113, %s114
      %p125 = scmp.eq.s32.totalorder %s35, 0
      %p126 = por %p124, %p125
      %p127 = scmp.ne.s32.totalorder %s113, %s114
      %p128 = scmp.eq.s32.totalorder %s36, 5
      %p129 = por %p127, %p128
      %p131 = scmp.ne.s32.totalorder %s114, %s130
      %p132 = scmp.eq.s32.totalorder %s36, 0
      %p133 = por %p131, %p132
      %s134 = ssub.s32 %s37, %s49
      %s135 = ssub.s32 %s38, %s45
      %s136 = sor.u32 %s134, %s135
      %p137 = scmp.eq.s32.totalorder %s136, 0
      %s139 = sadd.s32 %s138, 1
      %s140 = scalar_select %p137, %s138, %s139
      %p143 = pneg %p137
      %p144 = scmp.eq.s32.totalorder %s30, 5
      %p145 = por %p143, %p144
      %p146 = scmp.ne.s32.totalorder %s138, %s141
      %p147 = scmp.eq.s32.totalorder %s30, 0
      %p148 = por %p146, %p147
      %p149 = scmp.ne.s32.totalorder %s138, %s141
      %p150 = scmp.eq.s32.totalorder %s35, 5
      %p151 = por %p149, %p150
      %p152 = scmp.ne.s32.totalorder %s141, %s142
      %p153 = scmp.eq.s32.totalorder %s35, 0
      %p154 = por %p152, %p153
      %p155 = scmp.ne.s32.totalorder %s141, %s142
      %p156 = scmp.eq.s32.totalorder %s36, 5
      %p157 = por %p155, %p156
      %p159 = scmp.ne.s32.totalorder %s142, %s158
      %p160 = scmp.eq.s32.totalorder %s36, 0
      %p161 = por %p159, %p160
      %s163 = sadd.s32 %s162, 1
      %p166 = scmp.eq.s32.totalorder %s30, 5
      %p167 = scmp.ne.s32.totalorder %s162, %s164
      %p168 = scmp.eq.s32.totalorder %s30, 0
      %p169 = por %p167, %p168
      %p170 = scmp.ne.s32.totalorder %s162, %s164
      %p171 = scmp.eq.s32.totalorder %s35, 5
      %p172 = por %p170, %p171
      %p173 = scmp.ne.s32.totalorder %s164, %s165
      %p174 = scmp.eq.s32.totalorder %s35, 0
      %p175 = por %p173, %p174
      %p176 = scmp.ne.s32.totalorder %s164, %s165
      %p177 = scmp.eq.s32.totalorder %s36, 5
      %p178 = por %p176, %p177
      %p180 = scmp.ne.s32.totalorder %s165, %s179
      %p181 = scmp.eq.s32.totalorder %s36, 0
      %p182 = por %p180, %p181
      %s184 = sadd.s32 %s183, 1
      %p187 = scmp.eq.s32.totalorder %s30, 5
      %p188 = scmp.ne.s32.totalorder %s183, %s185
      %p189 = scmp.eq.s32.totalorder %s30, 0
      %p190 = por %p188, %p189
      %p191 = scmp.ne.s32.totalorder %s183, %s185
      %p192 = scmp.eq.s32.totalorder %s35, 5
      %p193 = por %p191, %p192
      %p194 = scmp.ne.s32.totalorder %s185, %s186
      %p195 = scmp.eq.s32.totalorder %s35, 0
      %p196 = por %p194, %p195
      %p197 = scmp.ne.s32.totalorder %s185, %s186
      %p198 = scmp.eq.s32.totalorder %s36, 5
      %p199 = por %p197, %p198
      %p201 = scmp.ne.s32.totalorder %s186, %s200
      %p202 = scmp.eq.s32.totalorder %s36, 0
      %p203 = por %p201, %p202
      %s204 = ssub.s32 %s37, %s49
      %s205 = ssub.s32 %s38, %s45
      %s206 = sor.u32 %s204, %s205
      %p207 = scmp.eq.s32.totalorder %s206, 0
      %s209 = sadd.s32 %s208, 1
      %s210 = scalar_select %p207, %s208, %s209
      %p213 = pneg %p207
      %p214 = scmp.eq.s32.totalorder %s30, 5
      %p215 = por %p213, %p214
      %p216 = scmp.ne.s32.totalorder %s208, %s211
      %p217 = scmp.eq.s32.totalorder %s30, 0
      %p218 = por %p216, %p217
      %p219 = scmp.ne.s32.totalorder %s208, %s211
      %p220 = scmp.eq.s32.totalorder %s35, 5
      %p221 = por %p219, %p220
      %p222 = scmp.ne.s32.totalorder %s211, %s212
      %p223 = scmp.eq.s32.totalorder %s35, 0
      %p224 = por %p222, %p223
      %p225 = scmp.ne.s32.totalorder %s211, %s212
      %p226 = scmp.eq.s32.totalorder %s36, 5
      %p227 = por %p225, %p226
      %p229 = scmp.ne.s32.totalorder %s212, %s228
      %p230 = scmp.eq.s32.totalorder %s36, 0
      %p231 = por %p229, %p230
      %s232 = ssub.s32 %s37, %s49
      %s233 = ssub.s32 %s38, %s45
      %s234 = sor.u32 %s232, %s233
      %p235 = scmp.eq.s32.totalorder %s234, 0
      %s237 = sadd.s32 %s236, 1
      %s238 = scalar_select %p235, %s236, %s237
      %p241 = pneg %p235
      %p242 = scmp.eq.s32.totalorder %s30, 5
      %p243 = por %p241, %p242
      %p244 = scmp.ne.s32.totalorder %s236, %s239
      %p245 = scmp.eq.s32.totalorder %s30, 0
      %p246 = por %p244, %p245
      %p247 = scmp.ne.s32.totalorder %s236, %s239
      %p248 = scmp.eq.s32.totalorder %s35, 5
      %p249 = por %p247, %p248
      %p250 = scmp.ne.s32.totalorder %s239, %s240
      %p251 = scmp.eq.s32.totalorder %s35, 0
      %p252 = por %p250, %p251
      %p253 = scmp.ne.s32.totalorder %s239, %s240
      %p254 = scmp.eq.s32.totalorder %s36, 5
      %p255 = por %p253, %p254
      %p257 = scmp.ne.s32.totalorder %s240, %s256
      %p258 = scmp.eq.s32.totalorder %s36, 0
      %p259 = por %p257, %p258
      %p260 = scmp.le.s32.totalorder 1, %s30
      %p261 = scmp.lt.s32.totalorder %s30, 7
      %p262 = pnand %p260, %p261
      %p263 = pneg %p262
      // Predicated region
      $region9: #{tpu_custom_call.1} parent=5 // pred_check
        _
      $region10: #{tpu_custom_call.1} parent=5 // pred_check_branch
        %265 = sbr.rel (%p262) target = $region12
      $region11: #{tpu_custom_call.1} parent=5 // pred_region
        %s266 = ssub.s32 %s30, 1
        // Predicated region
        $region13: #{tpu_custom_call.1} parent=11 // pred_check
          %p267 = pneg %p175
        $region14: #{tpu_custom_call.1} parent=11 // pred_check_branch
          %269 = sbr.rel (%p267) target = $region16
        $region15: #{tpu_custom_call.1} parent=11 // pred_region
          %s271 = ssub.s32 320, 320
          %272 = vsyncadd [#allocation9], %s271
          %s273 = sshll.u32 [#allocation10], 4
          %s274 = int_to_ptr.vmem [resolvable:$true] %s273
          %279 = dma.hbm_to_vmem [thread:$0]  %s4, 320, %s274, [#allocation9], 32, 32, 2
        $region16: #{tpu_custom_call.1} parent=11 // pred_fallthru
          _
        // Predicated region
        $region17: #{tpu_custom_call.1} parent=11 // pred_check
          %p280 = pneg %p196
        $region18: #{tpu_custom_call.1} parent=11 // pred_check_branch
          %282 = sbr.rel (%p280) target = $region20
        $region19: #{tpu_custom_call.1} parent=11 // pred_region
          %s284 = ssub.s32 512, 512
          %285 = vsyncadd [#allocation12], %s284
          %s286 = sshll.u32 [#allocation11], 4
          %s287 = int_to_ptr.vmem [resolvable:$true] %s286
          %292 = dma.hbm_to_vmem [thread:$0]  %s5, 512, %s287, [#allocation12], 128, 128, 8
        $region20: #{tpu_custom_call.1} parent=11 // pred_fallthru
          _
      $region12: #{tpu_custom_call.1} parent=5 // pred_fallthru
        _
      %p293 = scmp.lt.s32.totalorder %s30, 6
      // Predicated region
      $region21: #{tpu_custom_call.1} parent=5 // pred_check
        %p294 = pneg %p293
      $region22: #{tpu_custom_call.1} parent=5 // pred_check_branch
        %296 = sbr.rel (%p294) target = $region24
      $region23: #{tpu_custom_call.1} parent=5 // pred_region
        // Predicated region
        $region25: #{tpu_custom_call.1} parent=23 // pred_check
          %p297 = pneg %p64
        $region26: #{tpu_custom_call.1} parent=23 // pred_check_branch
          %299 = sbr.rel (%p297) target = $region28
        $region27: #{tpu_custom_call.1} parent=23 // pred_region
          %s300 = sand.u32 %s54, 1
          %s301 = scalar_lea.sflag [#allocation3], %s300
          %s302 = sand.u32 %s54, 1
          %s303 = smul.addr %s302, 24
          %s304 = scalar_lea.vmem [#allocation2], %s303
          %s306 = ssub.s32 384, 384
          %307 = vsyncadd %s301, %s306
          %s308 = smul.addr %s38, 6
          %s309 = smul.addr %s37, 18
          %s310 = sadd.s32 %s308, %s309
          %s311 = smul.addr %s310, 64
          %s312 = scalar_lea.hbm %s0, %s311
          %s313 = sshll.u32 %s304, 4
          %s314 = int_to_ptr.vmem [resolvable:$true] %s313
          %319 = dma.hbm_to_vmem [thread:$0]  %s312, 384, %s314, %s301, 64, 64, 4
        $region28: #{tpu_custom_call.1} parent=23 // pred_fallthru
          _
        // Predicated region
        $region29: #{tpu_custom_call.1} parent=23 // pred_check
          %p320 = pneg %p92
        $region30: #{tpu_custom_call.1} parent=23 // pred_check_branch
          %322 = sbr.rel (%p320) target = $region32
        $region31: #{tpu_custom_call.1} parent=23 // pred_region
          %s323 = sand.u32 %s30, 1
          %s324 = scalar_lea.sflag [#allocation6], %s323
          %s325 = sand.u32 %s82, 1
          %s326 = smul.addr %s325, 24
          %s327 = scalar_lea.vmem [#allocation5], %s326
          %s329 = ssub.s32 384, 384
          %330 = vsyncadd %s324, %s329
          %s331 = smul.addr %s38, 6
          %s332 = smul.addr %s37, 18
          %s333 = sadd.s32 %s331, %s332
          %s334 = smul.addr %s333, 64
          %s335 = scalar_lea.hbm %s1, %s334
          %s336 = sshll.u32 %s327, 4
          %s337 = int_to_ptr.vmem [resolvable:$true] %s336
          %342 = dma.hbm_to_vmem [thread:$0]  %s335, 384, %s337, %s324, 64, 64, 4
        $region32: #{tpu_custom_call.1} parent=23 // pred_fallthru
          _
        // Predicated region
        $region33: #{tpu_custom_call.1} parent=23 // pred_check
          %p343 = pneg %p120
        $region34: #{tpu_custom_call.1} parent=23 // pred_check_branch
          %345 = sbr.rel (%p343) target = $region36
        $region35: #{tpu_custom_call.1} parent=23 // pred_region
          %s346 = sand.u32 %s30, 1
          %s347 = scalar_lea.sflag [#allocation6], %s346
          %s348 = sand.u32 %s110, 1
          %s349 = smul.addr %s348, 20
          %s350 = scalar_lea.vmem [#allocation7], %s349
          %s352 = ssub.s32 320, 320
          %353 = vsyncadd %s347, %s352
          %s354 = smul.addr %s38, 5
          %s355 = smul.addr %s37, 15
          %s356 = sadd.s32 %s354, %s355
          %s357 = smul.addr %s356, 64
          %s358 = scalar_lea.hbm %s2, %s357
          %s359 = sshll.u32 %s350, 4
          %s360 = int_to_ptr.vmem [resolvable:$true] %s359
          %365 = dma.hbm_to_vmem [thread:$0]  %s358, 320, %s360, %s347, 64, 64, 4
        $region36: #{tpu_custom_call.1} parent=23 // pred_fallthru
          _
        // Predicated region
        $region37: #{tpu_custom_call.1} parent=23 // pred_check
          %p366 = pneg %p148
        $region38: #{tpu_custom_call.1} parent=23 // pred_check_branch
          %368 = sbr.rel (%p366) target = $region40
        $region39: #{tpu_custom_call.1} parent=23 // pred_region
          %s369 = sand.u32 %s30, 1
          %s370 = scalar_lea.sflag [#allocation9], %s369
          %s371 = sand.u32 %s138, 1
          %s372 = smul.addr %s371, 20
          %s373 = scalar_lea.vmem [#allocation8], %s372
          %s375 = ssub.s32 320, 320
          %376 = vsyncadd %s370, %s375
          %s377 = smul.addr %s38, 5
          %s378 = smul.addr %s37, 15
          %s379 = sadd.s32 %s377, %s378
          %s380 = smul.addr %s379, 64
          %s381 = scalar_lea.hbm %s3, %s380
          %s382 = sshll.u32 %s373, 4
          %s383 = int_to_ptr.vmem [resolvable:$true] %s382
          %388 = dma.hbm_to_vmem [thread:$0]  %s381, 320, %s383, %s370, 64, 64, 4
        $region40: #{tpu_custom_call.1} parent=23 // pred_fallthru
          _
      $region24: #{tpu_custom_call.1} parent=5 // pred_fallthru
        _
      %p389 = scmp.le.s32.totalorder 1, %s30
      %p390 = scmp.lt.s32.totalorder %s30, 7
      %p391 = pnand %p389, %p390
      %p392 = pneg %p391
      // Predicated region
      $region41: #{tpu_custom_call.1} parent=5 // pred_check
        _
      $region42: #{tpu_custom_call.1} parent=5 // pred_check_branch
        %394 = sbr.rel (%p391) target = $region44
      $region43: #{tpu_custom_call.1} parent=5 // pred_region
        %s395 = ssub.s32 %s30, 1
        %s396 = sand.u32 %s57, 1
        %s397 = scalar_lea.sflag [#allocation3], %s396
        %s398 = sand.u32 %s57, 1
        %s399 = smul.addr %s398, 24
        %s400 = scalar_lea.vmem [#allocation2], %s399
        // Predicated region
        $region45: #{tpu_custom_call.1} parent=43 // pred_check
          %p401 = pneg %p70
        $region46: #{tpu_custom_call.1} parent=43 // pred_check_branch
          %403 = sbr.rel (%p401) target = $region48
        $region47: #{tpu_custom_call.1} parent=43 // pred_region
          %404 = dma.done %s397, 384
        $region48: #{tpu_custom_call.1} parent=43 // pred_fallthru
          _
        %s405 = sand.u32 %s35, 1
        %s406 = scalar_lea.sflag [#allocation6], %s405
        %s407 = sand.u32 %s85, 1
        %s408 = smul.addr %s407, 24
        %s409 = scalar_lea.vmem [#allocation5], %s408
        // Predicated region
        $region49: #{tpu_custom_call.1} parent=43 // pred_check
          %p410 = pneg %p98
        $region50: #{tpu_custom_call.1} parent=43 // pred_check_branch
          %412 = sbr.rel (%p410) target = $region52
        $region51: #{tpu_custom_call.1} parent=43 // pred_region
          %413 = dma.done %s406, 384
        $region52: #{tpu_custom_call.1} parent=43 // pred_fallthru
          _
        %s414 = sand.u32 %s35, 1
        %s415 = scalar_lea.sflag [#allocation6], %s414
        %s416 = sand.u32 %s113, 1
        %s417 = smul.addr %s416, 20
        %s418 = scalar_lea.vmem [#allocation7], %s417
        // Predicated region
        $region53: #{tpu_custom_call.1} parent=43 // pred_check
          %p419 = pneg %p126
        $region54: #{tpu_custom_call.1} parent=43 // pred_check_branch
          %421 = sbr.rel (%p419) target = $region56
        $region55: #{tpu_custom_call.1} parent=43 // pred_region
          %422 = dma.done %s415, 320
        $region56: #{tpu_custom_call.1} parent=43 // pred_fallthru
          _
        %s423 = sand.u32 %s35, 1
        %s424 = scalar_lea.sflag [#allocation9], %s423
        %s425 = sand.u32 %s141, 1
        %s426 = smul.addr %s425, 20
        %s427 = scalar_lea.vmem [#allocation8], %s426
        // Predicated region
        $region57: #{tpu_custom_call.1} parent=43 // pred_check
          %p428 = pneg %p154
        $region58: #{tpu_custom_call.1} parent=43 // pred_check_branch
          %430 = sbr.rel (%p428) target = $region60
        $region59: #{tpu_custom_call.1} parent=43 // pred_region
          %431 = dma.done %s424, 320
        $region60: #{tpu_custom_call.1} parent=43 // pred_fallthru
          _
        // Predicated region
        $region61: #{tpu_custom_call.1} parent=43 // pred_check
          %p432 = pneg %p175
        $region62: #{tpu_custom_call.1} parent=43 // pred_check_branch
          %434 = sbr.rel (%p432) target = $region64
        $region63: #{tpu_custom_call.1} parent=43 // pred_region
          %435 = dma.done [#allocation9], 320
        $region64: #{tpu_custom_call.1} parent=43 // pred_fallthru
          _
        // Predicated region
        $region65: #{tpu_custom_call.1} parent=43 // pred_check
          %p436 = pneg %p196
        $region66: #{tpu_custom_call.1} parent=43 // pred_check_branch
          %438 = sbr.rel (%p436) target = $region68
        $region67: #{tpu_custom_call.1} parent=43 // pred_region
          %439 = dma.done [#allocation12], 512
        $region68: #{tpu_custom_call.1} parent=43 // pred_fallthru
          _
        %s440 = sand.u32 %s57, 1
        %s441 = scalar_lea.sflag [#allocation3], %s440
        %s442 = sand.u32 %s57, 1
        %s443 = smul.addr %s442, 24
        %s444 = scalar_lea.vmem [#allocation2], %s443
        %p445 = pneg %p70
        %p446 = pneg %p67
        %s447 = sand.u32 %s35, 1
        %s448 = scalar_lea.sflag [#allocation6], %s447
        %s449 = sand.u32 %s85, 1
        %s450 = smul.addr %s449, 24
        %s451 = scalar_lea.vmem [#allocation5], %s450
        %p452 = pneg %p98
        %p453 = pneg %p95
        %s454 = sand.u32 %s35, 1
        %s455 = scalar_lea.sflag [#allocation6], %s454
        %s456 = sand.u32 %s113, 1
        %s457 = smul.addr %s456, 20
        %s458 = scalar_lea.vmem [#allocation7], %s457
        %p459 = pneg %p126
        %p460 = pneg %p123
        %s461 = sand.u32 %s35, 1
        %s462 = scalar_lea.sflag [#allocation9], %s461
        %s463 = sand.u32 %s141, 1
        %s464 = smul.addr %s463, 20
        %s465 = scalar_lea.vmem [#allocation8], %s464
        %p466 = pneg %p154
        %p467 = pneg %p151
        %p468 = pneg %p175
        %p469 = pneg %p172
        %p470 = pneg %p196
        %p471 = pneg %p193
        %p472 = pneg %p224
        %p473 = pneg %p221
        %s474 = sand.u32 %s211, 1
        %s475 = scalar_lea.sflag [#allocation4], %s474
        %s476 = sand.u32 %s211, 1
        %s477 = smul.addr %s476, 16
        %s478 = scalar_lea.vmem [#allocation13], %s477
        %p479 = pneg %p252
        %p480 = pneg %p249
        %s481 = sand.u32 %s239, 1
        %s482 = scalar_lea.sflag [#allocation15], %s481
        %s483 = sand.u32 %s239, 1
        %s484 = smul.addr %s483, 2
        %s485 = scalar_lea.vmem [#allocation14], %s484
        %v487 = vld [vmem:[%s400] sm:$0xf]
        %v488 = vld [vmem:[%s400 + $0x4] sm:$0xf]
        %v489 = vld [vmem:[%s400 + $0x8] sm:$0xf]
        %v490 = vld [vmem:[%s400 + $0xc] sm:$0xf]
        %v491 = vld [vmem:[%s400 + $0x10] sm:$0xf]
        %v492 = vld [vmem:[%s409] sm:$0xf]
        %v493 = vld [vmem:[%s409 + $0x4] sm:$0xf]
        %v494 = vld [vmem:[%s409 + $0x8] sm:$0xf]
        %v495 = vld [vmem:[%s409 + $0xc] sm:$0xf]
        %v496 = vld [vmem:[%s409 + $0x10] sm:$0xf]
        %v497 = vld [vmem:[%s418] sm:$0xf]
        %v498 = vld [vmem:[%s418 + $0x4] sm:$0xf]
        %v499 = vld [vmem:[%s418 + $0x8] sm:$0xf]
        %v500 = vld [vmem:[%s418 + $0xc] sm:$0xf]
        %v501 = vld [vmem:[%s427] sm:$0xf]
        %v502 = vld [vmem:[%s427 + $0x4] sm:$0xf]
        %v503 = vld [vmem:[%s427 + $0x8] sm:$0xf]
        %v504 = vld [vmem:[%s427 + $0xc] sm:$0xf]
        %v505 = vld [vmem:[#allocation10] sm:$0x3]
        %s506 = scalar_lea.vmem [#allocation10], 2
        %v507 = vld [vmem:[%s506] sm:$0x3]
        %v512 = vunpack.c.l.b16 %v492
        %v513 = vunpack.c.l.b16 %v493
        %v514 = vunpack.c.l.b16 %v494
        %v515 = vunpack.c.l.b16 %v495
        %v516 = vpack.c.b16 %v513, %v512
        %v517 = vpack.c.b16 %v515, %v514
        %vm518 = vcmask 31744
        %v520 = vsel %vm518, %v516, 0
        %v523 = vsel %vm518, %v517, 0
        %vm525 = vcmask 1041408
        %v527 = vsel %vm525, %v507, 0
        %529 = vmatprep.subr.bf16.mxu0 0
        %530 = vmatpush1.bf16.msra.mxu0 %v527
        %531 = vmatprep.subr.bf16.mxu0 0
        %532 = vmatpush1.bf16.msra.mxu0 0
        %533 = vmatprep.subr.bf16.mxu0 0
        %534 = vmatpush1.bf16.msra.mxu0 0
        %535 = vmatprep.subr.bf16.mxu0 0
        %536 = vmatpush1.bf16.msra.mxu0 0
        %537 = vmatprep.subr.bf16.mxu0 0
        %538 = vmatpush1.bf16.msra.mxu0 0
        %539 = vmatprep.subr.bf16.mxu0 0
        %540 = vmatpush1.bf16.msra.mxu0 0
        %541 = vmatprep.subr.bf16.mxu0 0
        %542 = vmatpush1.bf16.msra.mxu0 0
        %543 = vmatprep.subr.bf16.mxu0 0
        %544 = vmatpush1.bf16.msra.mxu0 0
        %545 = vmatprep.subr.bf16.mxu0 0
        %546 = vmatpush1.bf16.msra.mxu0 0
        %547 = vmatprep.subr.bf16.mxu0 0
        %548 = vmatpush1.bf16.msra.mxu0 0
        %549 = vmatprep.subr.bf16.mxu0 0
        %550 = vmatpush1.bf16.msra.mxu0 0
        %551 = vmatprep.subr.bf16.mxu0 0
        %552 = vmatpush1.bf16.msra.mxu0 0
        %553 = vmatprep.subr.bf16.mxu0 0
        %554 = vmatpush1.bf16.msra.mxu0 0
        %555 = vmatprep.subr.bf16.mxu0 0
        %556 = vmatpush1.bf16.msra.mxu0 0
        %557 = vmatprep.subr.bf16.mxu0 0
        %558 = vmatpush1.bf16.msra.mxu0 0
        %559 = vmatprep.subr.bf16.mxu0 0
        %560 = vmatpush1.bf16.msra.mxu0 0
        %561 = vmatprep.mubr.bf16.mxu0 0
        %562 = vmatmul.mubr.bf16.gmra.mrb[0].mxu0 %v520
        %v563 = vpop.f32.mrb[0].mxu0
        %v564 = vadd.f32 0.0, %v563
        %v565 = vpop.f32.mrb[0].mxu0
        %v566 = vpop.f32.mrb[0].mxu0
        %v567 = vadd.f32 0.0, %v566
        %v568 = vpop.f32.mrb[0].mxu0
        %569 = vmatprep.mubr.bf16.mxu0 0
        %570 = vmatmul.mubr.bf16.gmra.mrb[0].mxu0 %v523
        %v571 = vpop.f32.mrb[0].mxu0
        %v572 = vadd.f32 0.0, %v571
        %v573 = vpop.f32.mrb[0].mxu0
        %v574 = vpop.f32.mrb[0].mxu0
        %v575 = vadd.f32 0.0, %v574
        %v576 = vpop.f32.mrb[0].mxu0
        %577 = vdwg.mxu0
        %v582 = vunpack.c.l.b16 %v487
        %v583 = vunpack.c.l.b16 %v488
        %v584 = vunpack.c.l.b16 %v489
        %v585 = vunpack.c.l.b16 %v490
        %v586 = vpack.c.b16 %v583, %v582
        %v587 = vpack.c.b16 %v585, %v584
        %v589 = vsel %vm518, %v586, 0
        %v592 = vsel %vm518, %v587, 0
        %v595 = vsel %vm525, %v505, 0
        %597 = vmatprep.subr.bf16.mxu0 0
        %598 = vmatpush1.bf16.msra.mxu0 %v595
        %599 = vmatprep.subr.bf16.mxu0 0
        %600 = vmatpush1.bf16.msra.mxu0 0
        %601 = vmatprep.subr.bf16.mxu0 0
        %602 = vmatpush1.bf16.msra.mxu0 0
        %603 = vmatprep.subr.bf16.mxu0 0
        %604 = vmatpush1.bf16.msra.mxu0 0
        %605 = vmatprep.subr.bf16.mxu0 0
        %606 = vmatpush1.bf16.msra.mxu0 0
        %607 = vmatprep.subr.bf16.mxu0 0
        %608 = vmatpush1.bf16.msra.mxu0 0
        %609 = vmatprep.subr.bf16.mxu0 0
        %610 = vmatpush1.bf16.msra.mxu0 0
        %611 = vmatprep.subr.bf16.mxu0 0
        %612 = vmatpush1.bf16.msra.mxu0 0
        %613 = vmatprep.subr.bf16.mxu0 0
        %614 = vmatpush1.bf16.msra.mxu0 0
        %615 = vmatprep.subr.bf16.mxu0 0
        %616 = vmatpush1.bf16.msra.mxu0 0
        %617 = vmatprep.subr.bf16.mxu0 0
        %618 = vmatpush1.bf16.msra.mxu0 0
        %619 = vmatprep.subr.bf16.mxu0 0
        %620 = vmatpush1.bf16.msra.mxu0 0
        %621 = vmatprep.subr.bf16.mxu0 0
        %622 = vmatpush1.bf16.msra.mxu0 0
        %623 = vmatprep.subr.bf16.mxu0 0
        %624 = vmatpush1.bf16.msra.mxu0 0
        %625 = vmatprep.subr.bf16.mxu0 0
        %626 = vmatpush1.bf16.msra.mxu0 0
        %627 = vmatprep.subr.bf16.mxu0 0
        %628 = vmatpush1.bf16.msra.mxu0 0
        %629 = vmatprep.mubr.bf16.mxu0 0
        %630 = vmatmul.mubr.bf16.gmra.mrb[0].mxu0 %v589
        %v631 = vpop.f32.mrb[0].mxu0
        %v632 = vadd.f32 %v564, %v631
        %v633 = vpop.f32.mrb[0].mxu0
        %v634 = vpop.f32.mrb[0].mxu0
        %v635 = vadd.f32 %v567, %v634
        %v636 = vpop.f32.mrb[0].mxu0
        %637 = vmatprep.mubr.bf16.mxu0 0
        %638 = vmatmul.mubr.bf16.gmra.mrb[0].mxu0 %v592
        %v639 = vpop.f32.mrb[0].mxu0
        %v640 = vadd.f32 %v572, %v639
        %v641 = vpop.f32.mrb[0].mxu0
        %v642 = vpop.f32.mrb[0].mxu0
        %v643 = vadd.f32 %v575, %v642
        %v644 = vpop.f32.mrb[0].mxu0
        %645 = vdwg.mxu0
        %s646 = scalar_lea.vmem [#allocation10], 4
        %v647 = vld [vmem:[%s646] sm:$0x3]
        %vm648 = vsmask.f32 7424
        %v649 = vshrl.u32 %v586, 16
        %v651 = vshll.u32 %v586, 16
        %v653 = vrot.slane %v651, 1
        %v654 = vor.u32 %v649, %v653
        %v655 = vshll.u32 %v587, 16
        %v657 = vrot.slane %v655, 1
        %v658 = vsel %vm648, %v654, %v657
        %v659 = vshrl.u32 %v587, 16
        %v661 = vor.u32 %v659, %v657
        %v663 = vsel %vm518, %v658, 0
        %v666 = vsel %vm518, %v661, 0
        %v669 = vsel %vm525, %v647, 0
        %671 = vmatprep.subr.bf16.mxu0 0
        %672 = vmatpush1.bf16.msra.mxu0 %v669
        %673 = vmatprep.subr.bf16.mxu0 0
        %674 = vmatpush1.bf16.msra.mxu0 0
        %675 = vmatprep.subr.bf16.mxu0 0
        %676 = vmatpush1.bf16.msra.mxu0 0
        %677 = vmatprep.subr.bf16.mxu0 0
        %678 = vmatpush1.bf16.msra.mxu0 0
        %679 = vmatprep.subr.bf16.mxu0 0
        %680 = vmatpush1.bf16.msra.mxu0 0
        %681 = vmatprep.subr.bf16.mxu0 0
        %682 = vmatpush1.bf16.msra.mxu0 0
        %683 = vmatprep.subr.bf16.mxu0 0
        %684 = vmatpush1.bf16.msra.mxu0 0
        %685 = vmatprep.subr.bf16.mxu0 0
        %686 = vmatpush1.bf16.msra.mxu0 0
        %687 = vmatprep.subr.bf16.mxu0 0
        %688 = vmatpush1.bf16.msra.mxu0 0
        %689 = vmatprep.subr.bf16.mxu0 0
        %690 = vmatpush1.bf16.msra.mxu0 0
        %691 = vmatprep.subr.bf16.mxu0 0
        %692 = vmatpush1.bf16.msra.mxu0 0
        %693 = vmatprep.subr.bf16.mxu0 0
        %694 = vmatpush1.bf16.msra.mxu0 0
        %695 = vmatprep.subr.bf16.mxu0 0
        %696 = vmatpush1.bf16.msra.mxu0 0
        %697 = vmatprep.subr.bf16.mxu0 0
        %698 = vmatpush1.bf16.msra.mxu0 0
        %699 = vmatprep.subr.bf16.mxu0 0
        %700 = vmatpush1.bf16.msra.mxu0 0
        %701 = vmatprep.subr.bf16.mxu0 0
        %702 = vmatpush1.bf16.msra.mxu0 0
        %703 = vmatprep.mubr.bf16.mxu0 0
        %704 = vmatmul.mubr.bf16.gmra.mrb[0].mxu0 %v663
        %v705 = vpop.f32.mrb[0].mxu0
        %v706 = vadd.f32 0.0, %v705
        %v707 = vpop.f32.mrb[0].mxu0
        %v708 = vpop.f32.mrb[0].mxu0
        %v709 = vadd.f32 0.0, %v708
        %v710 = vpop.f32.mrb[0].mxu0
        %711 = vmatprep.mubr.bf16.mxu0 0
        %712 = vmatmul.mubr.bf16.gmra.mrb[0].mxu0 %v666
        %v713 = vpop.f32.mrb[0].mxu0
        %v714 = vadd.f32 0.0, %v713
        %v715 = vpop.f32.mrb[0].mxu0
        %v716 = vpop.f32.mrb[0].mxu0
        %v717 = vadd.f32 0.0, %v716
        %v718 = vpop.f32.mrb[0].mxu0
        %719 = vdwg.mxu0
        %v720 = vadd.f32 %v632, %v706
        %v721 = vadd.f32 %v635, %v709
        %v722 = vadd.f32 %v640, %v714
        %v723 = vadd.f32 %v643, %v717
        %s724 = scalar_lea.vmem [#allocation10], 6
        %v725 = vld [vmem:[%s724] sm:$0x3]
        %v730 = vunpack.c.l.b16 %v497
        %v731 = vunpack.c.l.b16 %v498
        %v732 = vunpack.c.l.b16 %v499
        %v733 = vunpack.c.l.b16 %v500
        %v734 = vpack.c.b16 %v731, %v730
        %v735 = vpack.c.b16 %v733, %v732
        %v737 = vsel %vm518, %v734, 0
        %v740 = vsel %vm518, %v735, 0
        %v743 = vsel %vm525, %v725, 0
        %745 = vmatprep.subr.bf16.mxu0 0
        %746 = vmatpush1.bf16.msra.mxu0 %v743
        %747 = vmatprep.subr.bf16.mxu0 0
        %748 = vmatpush1.bf16.msra.mxu0 0
        %749 = vmatprep.subr.bf16.mxu0 0
        %750 = vmatpush1.bf16.msra.mxu0 0
        %751 = vmatprep.subr.bf16.mxu0 0
        %752 = vmatpush1.bf16.msra.mxu0 0
        %753 = vmatprep.subr.bf16.mxu0 0
        %754 = vmatpush1.bf16.msra.mxu0 0
        %755 = vmatprep.subr.bf16.mxu0 0
        %756 = vmatpush1.bf16.msra.mxu0 0
        %757 = vmatprep.subr.bf16.mxu0 0
        %758 = vmatpush1.bf16.msra.mxu0 0
        %759 = vmatprep.subr.bf16.mxu0 0
        %760 = vmatpush1.bf16.msra.mxu0 0
        %761 = vmatprep.subr.bf16.mxu0 0
        %762 = vmatpush1.bf16.msra.mxu0 0
        %763 = vmatprep.subr.bf16.mxu0 0
        %764 = vmatpush1.bf16.msra.mxu0 0
        %765 = vmatprep.subr.bf16.mxu0 0
        %766 = vmatpush1.bf16.msra.mxu0 0
        %767 = vmatprep.subr.bf16.mxu0 0
        %768 = vmatpush1.bf16.msra.mxu0 0
        %769 = vmatprep.subr.bf16.mxu0 0
        %770 = vmatpush1.bf16.msra.mxu0 0
        %771 = vmatprep.subr.bf16.mxu0 0
        %772 = vmatpush1.bf16.msra.mxu0 0
        %773 = vmatprep.subr.bf16.mxu0 0
        %774 = vmatpush1.bf16.msra.mxu0 0
        %775 = vmatprep.subr.bf16.mxu0 0
        %776 = vmatpush1.bf16.msra.mxu0 0
        %777 = vmatprep.mubr.bf16.mxu0 0
        %778 = vmatmul.mubr.bf16.gmra.mrb[0].mxu0 %v737
        %v779 = vpop.f32.mrb[0].mxu0
        %v780 = vadd.f32 0.0, %v779
        %v781 = vpop.f32.mrb[0].mxu0
        %v782 = vpop.f32.mrb[0].mxu0
        %v783 = vadd.f32 0.0, %v782
        %v784 = vpop.f32.mrb[0].mxu0
        %785 = vmatprep.mubr.bf16.mxu0 0
        %786 = vmatmul.mubr.bf16.gmra.mrb[0].mxu0 %v740
        %v787 = vpop.f32.mrb[0].mxu0
        %v788 = vadd.f32 0.0, %v787
        %v789 = vpop.f32.mrb[0].mxu0
        %v790 = vpop.f32.mrb[0].mxu0
        %v791 = vadd.f32 0.0, %v790
        %v792 = vpop.f32.mrb[0].mxu0
        %793 = vdwg.mxu0
        %v794 = vadd.f32 %v720, %v780
        %v795 = vadd.f32 %v721, %v783
        %v796 = vadd.f32 %v722, %v788
        %v797 = vadd.f32 %v723, %v791
        %s798 = scalar_lea.vmem [#allocation10], 8
        %v799 = vld [vmem:[%s798] sm:$0x3]
        %v804 = vunpack.c.l.b16 %v501
        %v805 = vunpack.c.l.b16 %v502
        %v806 = vunpack.c.l.b16 %v503
        %v807 = vunpack.c.l.b16 %v504
        %v808 = vpack.c.b16 %v805, %v804
        %v809 = vpack.c.b16 %v807, %v806
        %v811 = vsel %vm518, %v808, 0
        %v814 = vsel %vm518, %v809, 0
        %v817 = vsel %vm525, %v799, 0
        %819 = vmatprep.subr.bf16.mxu0 0
        %820 = vmatpush1.bf16.msra.mxu0 %v817
        %821 = vmatprep.subr.bf16.mxu0 0
        %822 = vmatpush1.bf16.msra.mxu0 0
        %823 = vmatprep.subr.bf16.mxu0 0
        %824 = vmatpush1.bf16.msra.mxu0 0
        %825 = vmatprep.subr.bf16.mxu0 0
        %826 = vmatpush1.bf16.msra.mxu0 0
        %827 = vmatprep.subr.bf16.mxu0 0
        %828 = vmatpush1.bf16.msra.mxu0 0
        %829 = vmatprep.subr.bf16.mxu0 0
        %830 = vmatpush1.bf16.msra.mxu0 0
        %831 = vmatprep.subr.bf16.mxu0 0
        %832 = vmatpush1.bf16.msra.mxu0 0
        %833 = vmatprep.subr.bf16.mxu0 0
        %834 = vmatpush1.bf16.msra.mxu0 0
        %835 = vmatprep.subr.bf16.mxu0 0
        %836 = vmatpush1.bf16.msra.mxu0 0
        %837 = vmatprep.subr.bf16.mxu0 0
        %838 = vmatpush1.bf16.msra.mxu0 0
        %839 = vmatprep.subr.bf16.mxu0 0
        %840 = vmatpush1.bf16.msra.mxu0 0
        %841 = vmatprep.subr.bf16.mxu0 0
        %842 = vmatpush1.bf16.msra.mxu0 0
        %843 = vmatprep.subr.bf16.mxu0 0
        %844 = vmatpush1.bf16.msra.mxu0 0
        %845 = vmatprep.subr.bf16.mxu0 0
        %846 = vmatpush1.bf16.msra.mxu0 0
        %847 = vmatprep.subr.bf16.mxu0 0
        %848 = vmatpush1.bf16.msra.mxu0 0
        %849 = vmatprep.subr.bf16.mxu0 0
        %850 = vmatpush1.bf16.msra.mxu0 0
        %851 = vmatprep.mubr.bf16.mxu0 0
        %852 = vmatmul.mubr.bf16.gmra.mrb[0].mxu0 %v811
        %v853 = vpop.f32.mrb[0].mxu0
        %v854 = vadd.f32 0.0, %v853
        %v855 = vpop.f32.mrb[0].mxu0
        %v856 = vpop.f32.mrb[0].mxu0
        %v857 = vadd.f32 0.0, %v856
        %v858 = vpop.f32.mrb[0].mxu0
        %859 = vmatprep.mubr.bf16.mxu0 0
        %860 = vmatmul.mubr.bf16.gmra.mrb[0].mxu0 %v814
        %v861 = vpop.f32.mrb[0].mxu0
        %v862 = vadd.f32 0.0, %v861
        %v863 = vpop.f32.mrb[0].mxu0
        %v864 = vpop.f32.mrb[0].mxu0
        %v865 = vadd.f32 0.0, %v864
        %v866 = vpop.f32.mrb[0].mxu0
        %867 = vdwg.mxu0
        %v868 = vadd.f32 %v794, %v854
        %v869 = vadd.f32 %v795, %v857
        %v870 = vadd.f32 %v796, %v862
        %v871 = vadd.f32 %v797, %v865
        %s872 = scalar_lea.vmem [#allocation10], 10
        %v873 = vld [vmem:[%s872] sm:$0x3]
        %v874 = vshrl.u32 %v734, 16
        %v876 = vshll.u32 %v734, 16
        %v878 = vrot.slane %v876, 1
        %v879 = vor.u32 %v874, %v878
        %v880 = vshll.u32 %v735, 16
        %v882 = vrot.slane %v880, 1
        %v883 = vsel %vm648, %v879, %v882
        %v884 = vshrl.u32 %v735, 16
        %v886 = vor.u32 %v884, %v882
        %v888 = vsel %vm518, %v883, 0
        %v891 = vsel %vm518, %v886, 0
        %v894 = vsel %vm525, %v873, 0
        %896 = vmatprep.subr.bf16.mxu0 0
        %897 = vmatpush1.bf16.msra.mxu0 %v894
        %898 = vmatprep.subr.bf16.mxu0 0
        %899 = vmatpush1.bf16.msra.mxu0 0
        %900 = vmatprep.subr.bf16.mxu0 0
        %901 = vmatpush1.bf16.msra.mxu0 0
        %902 = vmatprep.subr.bf16.mxu0 0
        %903 = vmatpush1.bf16.msra.mxu0 0
        %904 = vmatprep.subr.bf16.mxu0 0
        %905 = vmatpush1.bf16.msra.mxu0 0
        %906 = vmatprep.subr.bf16.mxu0 0
        %907 = vmatpush1.bf16.msra.mxu0 0
        %908 = vmatprep.subr.bf16.mxu0 0
        %909 = vmatpush1.bf16.msra.mxu0 0
        %910 = vmatprep.subr.bf16.mxu0 0
        %911 = vmatpush1.bf16.msra.mxu0 0
        %912 = vmatprep.subr.bf16.mxu0 0
        %913 = vmatpush1.bf16.msra.mxu0 0
        %914 = vmatprep.subr.bf16.mxu0 0
        %915 = vmatpush1.bf16.msra.mxu0 0
        %916 = vmatprep.subr.bf16.mxu0 0
        %917 = vmatpush1.bf16.msra.mxu0 0
        %918 = vmatprep.subr.bf16.mxu0 0
        %919 = vmatpush1.bf16.msra.mxu0 0
        %920 = vmatprep.subr.bf16.mxu0 0
        %921 = vmatpush1.bf16.msra.mxu0 0
        %922 = vmatprep.subr.bf16.mxu0 0
        %923 = vmatpush1.bf16.msra.mxu0 0
        %924 = vmatprep.subr.bf16.mxu0 0
        %925 = vmatpush1.bf16.msra.mxu0 0
        %926 = vmatprep.subr.bf16.mxu0 0
        %927 = vmatpush1.bf16.msra.mxu0 0
        %928 = vmatprep.mubr.bf16.mxu0 0
        %929 = vmatmul.mubr.bf16.gmra.mrb[0].mxu0 %v888
        %v930 = vpop.f32.mrb[0].mxu0
        %v931 = vadd.f32 0.0, %v930
        %v932 = vpop.f32.mrb[0].mxu0
        %v933 = vpop.f32.mrb[0].mxu0
        %v934 = vadd.f32 0.0, %v933
        %v935 = vpop.f32.mrb[0].mxu0
        %936 = vmatprep.mubr.bf16.mxu0 0
        %937 = vmatmul.mubr.bf16.gmra.mrb[0].mxu0 %v891
        %v938 = vpop.f32.mrb[0].mxu0
        %v939 = vadd.f32 0.0, %v938
        %v940 = vpop.f32.mrb[0].mxu0
        %v941 = vpop.f32.mrb[0].mxu0
        %v942 = vadd.f32 0.0, %v941
        %v943 = vpop.f32.mrb[0].mxu0
        %944 = vdwg.mxu0
        %v945 = vadd.f32 %v868, %v931
        %v946 = vadd.f32 %v869, %v934
        %v947 = vadd.f32 %v870, %v939
        %v948 = vadd.f32 %v871, %v942
        %s949 = scalar_lea.vmem [#allocation10], 12
        %v950 = vld [vmem:[%s949] sm:$0x3]
        %v952 = vunpack.c.l.b16 %v491
        %v953 = vpack.c.b16 %v584, %v583
        %v954 = vpack.c.b16 %v952, %v585
        %v956 = vshrl.u32 %v953, 16
        %v958 = vshll.u32 %v953, 16
        %v960 = vrot.slane %v958, 1
        %v961 = vor.u32 %v956, %v960
        %v963 = vshll.u32 %v954, 16
        %v965 = vrot.slane %v963, 1
        %v966 = vsel %vm648, %v961, %v965
        %v967 = vshrl.u32 %v954, 16
        %v969 = vor.u32 %v967, %v965
        %v971 = vsel %vm518, %v966, 0
        %v974 = vsel %vm518, %v969, 0
        %v977 = vsel %vm525, %v950, 0
        %979 = vmatprep.subr.bf16.mxu0 0
        %980 = vmatpush1.bf16.msra.mxu0 %v977
        %981 = vmatprep.subr.bf16.mxu0 0
        %982 = vmatpush1.bf16.msra.mxu0 0
        %983 = vmatprep.subr.bf16.mxu0 0
        %984 = vmatpush1.bf16.msra.mxu0 0
        %985 = vmatprep.subr.bf16.mxu0 0
        %986 = vmatpush1.bf16.msra.mxu0 0
        %987 = vmatprep.subr.bf16.mxu0 0
        %988 = vmatpush1.bf16.msra.mxu0 0
        %989 = vmatprep.subr.bf16.mxu0 0
        %990 = vmatpush1.bf16.msra.mxu0 0
        %991 = vmatprep.subr.bf16.mxu0 0
        %992 = vmatpush1.bf16.msra.mxu0 0
        %993 = vmatprep.subr.bf16.mxu0 0
        %994 = vmatpush1.bf16.msra.mxu0 0
        %995 = vmatprep.subr.bf16.mxu0 0
        %996 = vmatpush1.bf16.msra.mxu0 0
        %997 = vmatprep.subr.bf16.mxu0 0
        %998 = vmatpush1.bf16.msra.mxu0 0
        %999 = vmatprep.subr.bf16.mxu0 0
        %1000 = vmatpush1.bf16.msra.mxu0 0
        %1001 = vmatprep.subr.bf16.mxu0 0
        %1002 = vmatpush1.bf16.msra.mxu0 0
        %1003 = vmatprep.subr.bf16.mxu0 0
        %1004 = vmatpush1.bf16.msra.mxu0 0
        %1005 = vmatprep.subr.bf16.mxu0 0
        %1006 = vmatpush1.bf16.msra.mxu0 0
        %1007 = vmatprep.subr.bf16.mxu0 0
        %1008 = vmatpush1.bf16.msra.mxu0 0
        %1009 = vmatprep.subr.bf16.mxu0 0
        %1010 = vmatpush1.bf16.msra.mxu0 0
        %1011 = vmatprep.mubr.bf16.mxu0 0
        %1012 = vmatmul.mubr.bf16.gmra.mrb[0].mxu0 %v971
        %v1013 = vpop.f32.mrb[0].mxu0
        %v1014 = vadd.f32 0.0, %v1013
        %v1015 = vpop.f32.mrb[0].mxu0
        %v1016 = vpop.f32.mrb[0].mxu0
        %v1017 = vadd.f32 0.0, %v1016
        %v1018 = vpop.f32.mrb[0].mxu0
        %1019 = vmatprep.mubr.bf16.mxu0 0
        %1020 = vmatmul.mubr.bf16.gmra.mrb[0].mxu0 %v974
        %v1021 = vpop.f32.mrb[0].mxu0
        %v1022 = vadd.f32 0.0, %v1021
        %v1023 = vpop.f32.mrb[0].mxu0
        %v1024 = vpop.f32.mrb[0].mxu0
        %v1025 = vadd.f32 0.0, %v1024
        %v1026 = vpop.f32.mrb[0].mxu0
        %1027 = vdwg.mxu0
        %v1028 = vadd.f32 %v945, %v1014
        %v1029 = vadd.f32 %v946, %v1017
        %v1030 = vadd.f32 %v947, %v1022
        %v1031 = vadd.f32 %v948, %v1025
        %s1032 = scalar_lea.vmem [#allocation10], 14
        %v1033 = vld [vmem:[%s1032] sm:$0x3]
        %v1035 = vunpack.c.l.b16 %v496
        %v1036 = vpack.c.b16 %v514, %v513
        %v1037 = vpack.c.b16 %v1035, %v515
        %v1039 = vshrl.u32 %v1036, 16
        %v1041 = vshll.u32 %v1036, 16
        %v1043 = vrot.slane %v1041, 1
        %v1044 = vor.u32 %v1039, %v1043
        %v1046 = vshll.u32 %v1037, 16
        %v1048 = vrot.slane %v1046, 1
        %v1049 = vsel %vm648, %v1044, %v1048
        %v1050 = vshrl.u32 %v1037, 16
        %v1052 = vor.u32 %v1050, %v1048
        %v1054 = vsel %vm518, %v1049, 0
        %v1057 = vsel %vm518, %v1052, 0
        %v1060 = vsel %vm525, %v1033, 0
        %1062 = vmatprep.subr.bf16.mxu0 0
        %1063 = vmatpush1.bf16.msra.mxu0 %v1060
        %1064 = vmatprep.subr.bf16.mxu0 0
        %1065 = vmatpush1.bf16.msra.mxu0 0
        %1066 = vmatprep.subr.bf16.mxu0 0
        %1067 = vmatpush1.bf16.msra.mxu0 0
        %1068 = vmatprep.subr.bf16.mxu0 0
        %1069 = vmatpush1.bf16.msra.mxu0 0
        %1070 = vmatprep.subr.bf16.mxu0 0
        %1071 = vmatpush1.bf16.msra.mxu0 0
        %1072 = vmatprep.subr.bf16.mxu0 0
        %1073 = vmatpush1.bf16.msra.mxu0 0
        %1074 = vmatprep.subr.bf16.mxu0 0
        %1075 = vmatpush1.bf16.msra.mxu0 0
        %1076 = vmatprep.subr.bf16.mxu0 0
        %1077 = vmatpush1.bf16.msra.mxu0 0
        %1078 = vmatprep.subr.bf16.mxu0 0
        %1079 = vmatpush1.bf16.msra.mxu0 0
        %1080 = vmatprep.subr.bf16.mxu0 0
        %1081 = vmatpush1.bf16.msra.mxu0 0
        %1082 = vmatprep.subr.bf16.mxu0 0
        %1083 = vmatpush1.bf16.msra.mxu0 0
        %1084 = vmatprep.subr.bf16.mxu0 0
        %1085 = vmatpush1.bf16.msra.mxu0 0
        %1086 = vmatprep.subr.bf16.mxu0 0
        %1087 = vmatpush1.bf16.msra.mxu0 0
        %1088 = vmatprep.subr.bf16.mxu0 0
        %1089 = vmatpush1.bf16.msra.mxu0 0
        %1090 = vmatprep.subr.bf16.mxu0 0
        %1091 = vmatpush1.bf16.msra.mxu0 0
        %1092 = vmatprep.subr.bf16.mxu0 0
        %1093 = vmatpush1.bf16.msra.mxu0 0
        %1094 = vmatprep.mubr.bf16.mxu0 0
        %1095 = vmatmul.mubr.bf16.gmra.mrb[0].mxu0 %v1054
        %v1096 = vpop.f32.mrb[0].mxu0
        %v1097 = vadd.f32 0.0, %v1096
        %v1098 = vpop.f32.mrb[0].mxu0
        %v1099 = vpop.f32.mrb[0].mxu0
        %v1100 = vadd.f32 0.0, %v1099
        %v1101 = vpop.f32.mrb[0].mxu0
        %1102 = vmatprep.mubr.bf16.mxu0 0
        %1103 = vmatmul.mubr.bf16.gmra.mrb[0].mxu0 %v1057
        %v1104 = vpop.f32.mrb[0].mxu0
        %v1105 = vadd.f32 0.0, %v1104
        %v1106 = vpop.f32.mrb[0].mxu0
        %v1107 = vpop.f32.mrb[0].mxu0
        %v1108 = vadd.f32 0.0, %v1107
        %v1109 = vpop.f32.mrb[0].mxu0
        %1110 = vdwg.mxu0
        %v1111 = vadd.f32 %v1028, %v1097
        %v1112 = vadd.f32 %v1029, %v1100
        %v1113 = vadd.f32 %v1030, %v1105
        %v1114 = vadd.f32 %v1031, %v1108
        %s1115 = scalar_lea.vmem [#allocation10], 16
        %v1116 = vld [vmem:[%s1115] sm:$0x3]
        %vm1117 = vcmask 1046528
        %v1118 = vrot.slane %v953, 1
        %v1119 = vrot.slane %v954, 1
        %v1120 = vsel %vm1117, %v1118, %v1119
        %v1122 = vsel %vm518, %v1120, 0
        %v1125 = vsel %vm518, %v1119, 0
        %v1128 = vsel %vm525, %v1116, 0
        %1130 = vmatprep.subr.bf16.mxu0 0
        %1131 = vmatpush1.bf16.msra.mxu0 %v1128
        %1132 = vmatprep.subr.bf16.mxu0 0
        %1133 = vmatpush1.bf16.msra.mxu0 0
        %1134 = vmatprep.subr.bf16.mxu0 0
        %1135 = vmatpush1.bf16.msra.mxu0 0
        %1136 = vmatprep.subr.bf16.mxu0 0
        %1137 = vmatpush1.bf16.msra.mxu0 0
        %1138 = vmatprep.subr.bf16.mxu0 0
        %1139 = vmatpush1.bf16.msra.mxu0 0
        %1140 = vmatprep.subr.bf16.mxu0 0
        %1141 = vmatpush1.bf16.msra.mxu0 0
        %1142 = vmatprep.subr.bf16.mxu0 0
        %1143 = vmatpush1.bf16.msra.mxu0 0
        %1144 = vmatprep.subr.bf16.mxu0 0
        %1145 = vmatpush1.bf16.msra.mxu0 0
        %1146 = vmatprep.subr.bf16.mxu0 0
        %1147 = vmatpush1.bf16.msra.mxu0 0
        %1148 = vmatprep.subr.bf16.mxu0 0
        %1149 = vmatpush1.bf16.msra.mxu0 0
        %1150 = vmatprep.subr.bf16.mxu0 0
        %1151 = vmatpush1.bf16.msra.mxu0 0
        %1152 = vmatprep.subr.bf16.mxu0 0
        %1153 = vmatpush1.bf16.msra.mxu0 0
        %1154 = vmatprep.subr.bf16.mxu0 0
        %1155 = vmatpush1.bf16.msra.mxu0 0
        %1156 = vmatprep.subr.bf16.mxu0 0
        %1157 = vmatpush1.bf16.msra.mxu0 0
        %1158 = vmatprep.subr.bf16.mxu0 0
        %1159 = vmatpush1.bf16.msra.mxu0 0
        %1160 = vmatprep.subr.bf16.mxu0 0
        %1161 = vmatpush1.bf16.msra.mxu0 0
        %1162 = vmatprep.mubr.bf16.mxu0 0
        %1163 = vmatmul.mubr.bf16.gmra.mrb[0].mxu0 %v1122
        %v1164 = vpop.f32.mrb[0].mxu0
        %v1165 = vadd.f32 0.0, %v1164
        %v1166 = vpop.f32.mrb[0].mxu0
        %v1167 = vpop.f32.mrb[0].mxu0
        %v1168 = vadd.f32 0.0, %v1167
        %v1169 = vpop.f32.mrb[0].mxu0
        %1170 = vmatprep.mubr.bf16.mxu0 0
        %1171 = vmatmul.mubr.bf16.gmra.mrb[0].mxu0 %v1125
        %v1172 = vpop.f32.mrb[0].mxu0
        %v1173 = vadd.f32 0.0, %v1172
        %v1174 = vpop.f32.mrb[0].mxu0
        %v1175 = vpop.f32.mrb[0].mxu0
        %v1176 = vadd.f32 0.0, %v1175
        %v1177 = vpop.f32.mrb[0].mxu0
        %1178 = vdwg.mxu0
        %v1179 = vadd.f32 %v1111, %v1165
        %v1180 = vadd.f32 %v1112, %v1168
        %v1181 = vadd.f32 %v1113, %v1173
        %v1182 = vadd.f32 %v1114, %v1176
        %vm1183 = vsmask.f32 3328
        %vm1184 = vsmask.f32 7440
        %vm1185 = vmor %vm1183, %vm1184
        %v1187 = vshrl.u32 %v497, 16
        %v1189 = vrot.slane %v1187, 4
        %v1190 = vshll.u32 %v497, 16
        %v1192 = vrot.slane %v1190, 5
        %v1193 = vor.u32 %v1189, %v1192
        %v1194 = vrot.slane %v1193, 4
        %v1196 = vshll.u32 %v498, 16
        %v1198 = vrot.slane %v1196, 5
        %v1199 = vsel %vm1185, %v1194, %v1198
        %v1200 = vshrl.u32 %v498, 16
        %v1202 = vrot.slane %v1200, 4
        %v1203 = vor.u32 %v1202, %v1198
        %v1204 = vrot.slane %v1203, 4
        %v1206 = vshll.u32 %v499, 16
        %v1208 = vrot.slane %v1206, 5
        %v1209 = vsel %vm1185, %v1204, %v1208
        %v1210 = vshrl.u32 %v499, 16
        %v1212 = vrot.slane %v1210, 4
        %v1213 = vor.u32 %v1212, %v1208
        %v1214 = vrot.slane %v1213, 4
        %v1216 = vshll.u32 %v500, 16
        %v1218 = vrot.slane %v1216, 5
        %v1219 = vsel %vm1185, %v1214, %v1218
        %v1220 = vshrl.u32 %v500, 16
        %v1222 = vrot.slane %v1220, 4
        %v1223 = vor.u32 %v1222, %v1218
        %v1224 = vrot.slane %v1223, 4
        %v1229 = vmax.bf16 %v501, %v1199
        %v1230 = vmax.bf16 %v502, %v1209
        %v1231 = vmax.bf16 %v503, %v1219
        %v1232 = vmax.bf16 %v504, %v1224
        %v1234 = vshrl.u32 %v488, 16
        %v1236 = vrot.slane %v1234, 4
        %v1237 = vshll.u32 %v488, 16
        %v1239 = vrot.slane %v1237, 5
        %v1240 = vor.u32 %v1236, %v1239
        %v1241 = vrot.slane %v1240, 4
        %v1243 = vshll.u32 %v489, 16
        %v1245 = vrot.slane %v1243, 5
        %v1246 = vsel %vm1185, %v1241, %v1245
        %v1247 = vshrl.u32 %v489, 16
        %v1249 = vrot.slane %v1247, 4
        %v1250 = vor.u32 %v1249, %v1245
        %v1251 = vrot.slane %v1250, 4
        %v1253 = vshll.u32 %v490, 16
        %v1255 = vrot.slane %v1253, 5
        %v1256 = vsel %vm1185, %v1251, %v1255
        %v1257 = vshrl.u32 %v490, 16
        %v1259 = vrot.slane %v1257, 4
        %v1260 = vor.u32 %v1259, %v1255
        %v1261 = vrot.slane %v1260, 4
        %v1263 = vshll.u32 %v491, 16
        %v1265 = vrot.slane %v1263, 5
        %v1266 = vsel %vm1185, %v1261, %v1265
        %v1267 = vshrl.u32 %v491, 16
        %v1269 = vrot.slane %v1267, 4
        %v1270 = vor.u32 %v1269, %v1265
        %v1271 = vrot.slane %v1270, 4
        %v1276 = vmax.bf16 %v493, %v1246
        %v1277 = vmax.bf16 %v494, %v1256
        %v1278 = vmax.bf16 %v495, %v1266
        %v1279 = vmax.bf16 %v496, %v1271
        %v1281 = vshrl.u32 %v1276, 16
        %v1283 = vrot.slane %v1281, 4
        %v1284 = vshll.u32 %v1276, 16
        %v1286 = vrot.slane %v1284, 5
        %v1287 = vor.u32 %v1283, %v1286
        %v1288 = vrot.slane %v1287, 4
        %v1290 = vshll.u32 %v1277, 16
        %v1292 = vrot.slane %v1290, 5
        %v1293 = vsel %vm1185, %v1288, %v1292
        %v1294 = vshrl.u32 %v1277, 16
        %v1296 = vrot.slane %v1294, 4
        %v1297 = vor.u32 %v1296, %v1292
        %v1298 = vrot.slane %v1297, 4
        %v1300 = vshll.u32 %v1278, 16
        %v1302 = vrot.slane %v1300, 5
        %v1303 = vsel %vm1185, %v1298, %v1302
        %v1304 = vshrl.u32 %v1278, 16
        %v1306 = vrot.slane %v1304, 4
        %v1307 = vor.u32 %v1306, %v1302
        %v1308 = vrot.slane %v1307, 4
        %v1310 = vshll.u32 %v1279, 16
        %v1312 = vrot.slane %v1310, 5
        %v1313 = vsel %vm1185, %v1308, %v1312
        %v1314 = vshrl.u32 %v1279, 16
        %v1316 = vrot.slane %v1314, 4
        %v1317 = vor.u32 %v1316, %v1312
        %v1318 = vrot.slane %v1317, 4
        %v1323 = vmax.bf16 %v1229, %v1293
        %v1324 = vmax.bf16 %v1230, %v1303
        %v1325 = vmax.bf16 %v1231, %v1313
        %v1326 = vmax.bf16 %v1232, %v1318
        %s1327 = scalar_lea.vmem [#allocation10], 18
        %v1328 = vld [vmem:[%s1327] sm:$0x3]
        %v1333 = vunpack.c.l.b16 %v1323
        %v1334 = vunpack.c.l.b16 %v1324
        %v1335 = vunpack.c.l.b16 %v1325
        %v1336 = vunpack.c.l.b16 %v1326
        %v1337 = vpack.c.b16 %v1334, %v1333
        %v1338 = vpack.c.b16 %v1336, %v1335
        %v1340 = vsel %vm518, %v1337, 0
        %v1343 = vsel %vm518, %v1338, 0
        %v1346 = vsel %vm525, %v1328, 0
        %1348 = vmatprep.subr.bf16.mxu0 0
        %1349 = vmatpush1.bf16.msra.mxu0 %v1346
        %1350 = vmatprep.subr.bf16.mxu0 0
        %1351 = vmatpush1.bf16.msra.mxu0 0
        %1352 = vmatprep.subr.bf16.mxu0 0
        %1353 = vmatpush1.bf16.msra.mxu0 0
        %1354 = vmatprep.subr.bf16.mxu0 0
        %1355 = vmatpush1.bf16.msra.mxu0 0
        %1356 = vmatprep.subr.bf16.mxu0 0
        %1357 = vmatpush1.bf16.msra.mxu0 0
        %1358 = vmatprep.subr.bf16.mxu0 0
        %1359 = vmatpush1.bf16.msra.mxu0 0
        %1360 = vmatprep.subr.bf16.mxu0 0
        %1361 = vmatpush1.bf16.msra.mxu0 0
        %1362 = vmatprep.subr.bf16.mxu0 0
        %1363 = vmatpush1.bf16.msra.mxu0 0
        %1364 = vmatprep.subr.bf16.mxu0 0
        %1365 = vmatpush1.bf16.msra.mxu0 0
        %1366 = vmatprep.subr.bf16.mxu0 0
        %1367 = vmatpush1.bf16.msra.mxu0 0
        %1368 = vmatprep.subr.bf16.mxu0 0
        %1369 = vmatpush1.bf16.msra.mxu0 0
        %1370 = vmatprep.subr.bf16.mxu0 0
        %1371 = vmatpush1.bf16.msra.mxu0 0
        %1372 = vmatprep.subr.bf16.mxu0 0
        %1373 = vmatpush1.bf16.msra.mxu0 0
        %1374 = vmatprep.subr.bf16.mxu0 0
        %1375 = vmatpush1.bf16.msra.mxu0 0
        %1376 = vmatprep.subr.bf16.mxu0 0
        %1377 = vmatpush1.bf16.msra.mxu0 0
        %1378 = vmatprep.subr.bf16.mxu0 0
        %1379 = vmatpush1.bf16.msra.mxu0 0
        %1380 = vmatprep.mubr.bf16.mxu0 0
        %1381 = vmatmul.mubr.bf16.gmra.mrb[0].mxu0 %v1340
        %v1382 = vpop.f32.mrb[0].mxu0
        %v1383 = vadd.f32 0.0, %v1382
        %v1384 = vpop.f32.mrb[0].mxu0
        %v1385 = vpop.f32.mrb[0].mxu0
        %v1386 = vadd.f32 0.0, %v1385
        %v1387 = vpop.f32.mrb[0].mxu0
        %1388 = vmatprep.mubr.bf16.mxu0 0
        %1389 = vmatmul.mubr.bf16.gmra.mrb[0].mxu0 %v1343
        %v1390 = vpop.f32.mrb[0].mxu0
        %v1391 = vadd.f32 0.0, %v1390
        %v1392 = vpop.f32.mrb[0].mxu0
        %v1393 = vpop.f32.mrb[0].mxu0
        %v1394 = vadd.f32 0.0, %v1393
        %v1395 = vpop.f32.mrb[0].mxu0
        %1396 = vdwg.mxu0
        %v1397 = vadd.f32 %v1179, %v1383
        %v1398 = vadd.f32 %v1180, %v1386
        %v1399 = vadd.f32 %v1181, %v1391
        %v1400 = vadd.f32 %v1182, %v1394
        %v1401 = vpack.c.bf16 %v1398, %v1397
        %v1402 = vpack.c.bf16 %v1400, %v1399
        %v1405 = vunpack.c.l.b16 %v1401
        %v1406 = vunpack.c.h.b16 %v1401
        %v1407 = vunpack.c.l.b16 %v1402
        %v1408 = vunpack.c.h.b16 %v1402
        %v1409 = vpack.c.b16 %v1405, %v1405
        %v1410 = vpack.c.b16 %v1406, %v1406
        %v1411 = vpack.c.b16 %v1407, %v1407
        %v1412 = vpack.c.b16 %v1408, %v1408
        %1417 = vst [vmem:[%s478] sm:$0xf] %v1409
        %1418 = vst [vmem:[%s478 + $0x4] sm:$0xf] %v1410
        %1419 = vst [vmem:[%s478 + $0x8] sm:$0xf] %v1411
        %vm1420 = vcmask 1041408
        %vm1421 = vsmask.f32 1280
        %vm1422 = vmand %vm1420, %vm1421
        %v1423 = vld [vmem:[%s478 + $0xc] sm:$0x3]
        %v1424 = vsel %vm1422, %v1412, %v1423
        %1425 = vst [vmem:[%s478 + $0xc] sm:$0x3] %v1424
        %v1426 = vld [vmem:[#allocation11] sm:$0xff]
        %v1427 = vld [vmem:[#allocation11 + $0x8] sm:$0xff]
        %v1428 = vld [vmem:[#allocation11 + $0x10] sm:$0xff]
        %v1429 = vld [vmem:[#allocation11 + $0x18] sm:$0x7]
        %1431 = vset.pattern.permute.xlu0 0
        %1432 = vperm.xlu0 %1431, %v1426
        %v1433 = vpop.permute.xlu0 %1432
        %1436 = vset.pattern.permute.xlu0 0
        %1437 = vperm.xlu0 %1436, %v1427
        %v1438 = vpop.permute.xlu0 %1437
        %1441 = vset.pattern.permute.xlu0 0
        %1442 = vperm.xlu0 %1441, %v1428
        %v1443 = vpop.permute.xlu0 %1442
        %1446 = vset.pattern.permute.xlu0 0
        %1447 = vperm.xlu0 %1446, %v1429
        %v1448 = vpop.permute.xlu0 %1447
        %v1450 = vmul.f32 %v1397, %v1433
        %v1451 = vmul.f32 %v1398, %v1438
        %v1452 = vmul.f32 %v1399, %v1443
        %v1453 = vmul.f32 %v1400, %v1448
        %v1454 = vadd.f32 %v1450, %v1451
        %v1455 = vadd.f32 %v1454, %v1452
        %vm1456 = vcmask 1042432
        %v1457 = vsel %vm1456, %v1453, 0.0
        %v1458 = vadd.f32 %v1455, %v1457
        %v1459 = vrot.slane %v1458, 4
        %v1460 = vadd.f32 %v1458, %v1459
        %v1461 = vrot.slane %v1460, 2
        %v1462 = vadd.f32 %v1460, %v1461
        %v1463 = vrot.slane %v1462, 1
        %v1464 = vadd.f32 %v1462, %v1463
        %v1465 = vmul.f32 %v1450, %v1450
        %v1466 = vmul.f32 %v1451, %v1451
        %v1467 = vmul.f32 %v1452, %v1452
        %v1468 = vmul.f32 %v1453, %v1453
        %v1469 = vadd.f32 %v1465, %v1466
        %v1470 = vadd.f32 %v1469, %v1467
        %v1471 = vsel %vm1456, %v1468, 0.0
        %v1472 = vadd.f32 %v1470, %v1471
        %v1473 = vrot.slane %v1472, 4
        %v1474 = vadd.f32 %v1472, %v1473
        %v1475 = vrot.slane %v1474, 2
        %v1476 = vadd.f32 %v1474, %v1475
        %v1477 = vrot.slane %v1476, 1
        %v1478 = vadd.f32 %v1476, %v1477
        %vm1479 = vcmask 1040384
        %v1480 = vsel %vm1479, %v1464, %v1478
        %1481 = vst [vmem:[%s485] sm:$0x3] %v1480
        %s1482 = sand.u32 %s211, 1
        %s1483 = scalar_lea.sflag [#allocation4], %s1482
        %s1484 = sand.u32 %s211, 1
        %s1485 = smul.addr %s1484, 16
        %s1486 = scalar_lea.vmem [#allocation13], %s1485
        %s1487 = sand.u32 %s239, 1
        %s1488 = scalar_lea.sflag [#allocation15], %s1487
        %s1489 = sand.u32 %s239, 1
        %s1490 = smul.addr %s1489, 2
        %s1491 = scalar_lea.vmem [#allocation14], %s1490
        // Predicated region
        $region69: #{tpu_custom_call.1} parent=43 // pred_check
          %p1492 = pneg %p221
        $region70: #{tpu_custom_call.1} parent=43 // pred_check_branch
          %1494 = sbr.rel (%p1492) target = $region72
        $region71: #{tpu_custom_call.1} parent=43 // pred_region
          %s1496 = ssub.s32 256, 256
          %1497 = vsyncadd %s1483, %s1496
          %s1498 = smul.addr %s40, 4
          %s1499 = smul.addr %s39, 12
          %s1500 = sadd.s32 %s1498, %s1499
          %s1501 = smul.addr %s1500, 64
          %s1502 = scalar_lea.hbm %s6, %s1501
          %s1503 = sshll.u32 %s1486, 4
          %s1504 = int_to_ptr.vmem [resolvable:$true] %s1503
          %1509 = dma.vmem_to_hbm [thread:$0]  %s1504, 256, %s1502, %s1483, 64, 64, 4
        $region72: #{tpu_custom_call.1} parent=43 // pred_fallthru
          _
        // Predicated region
        $region73: #{tpu_custom_call.1} parent=43 // pred_check
          %p1510 = pneg %p249
        $region74: #{tpu_custom_call.1} parent=43 // pred_check_branch
          %1512 = sbr.rel (%p1510) target = $region76
        $region75: #{tpu_custom_call.1} parent=43 // pred_region
          %s1514 = ssub.s32 32, 32
          %1515 = vsyncadd %s1488, %s1514
          %s1516 = smul.addr %s39, 3
          %s1517 = sadd.s32 %s40, %s1516
          %s1518 = smul.addr %s1517, 32
          %s1519 = scalar_lea.hbm %s7, %s1518
          %s1521 = sshll.u32 %s1491, 4
          %s1522 = int_to_ptr.vmem [resolvable:$true] %s1521
          %1524 = dma.vmem_to_hbm [thread:$0]  %s1522, 32, %s1519, %s1488
        $region76: #{tpu_custom_call.1} parent=43 // pred_fallthru
          _
      $region44: #{tpu_custom_call.1} parent=5 // pred_fallthru
        _
      %p1525 = scmp.le.s32.totalorder 2, %s30
      // Predicated region
      $region77: #{tpu_custom_call.1} parent=5 // pred_check
        %p1526 = pneg %p1525
      $region78: #{tpu_custom_call.1} parent=5 // pred_check_branch
        %1528 = sbr.rel (%p1526) target = $region80
      $region79: #{tpu_custom_call.1} parent=5 // pred_region
        %s1529 = ssub.s32 %s30, 2
        // Predicated region
        $region81: #{tpu_custom_call.1} parent=79 // pred_check
          %p1530 = pneg %p227
        $region82: #{tpu_custom_call.1} parent=79 // pred_check_branch
          %1532 = sbr.rel (%p1530) target = $region84
        $region83: #{tpu_custom_call.1} parent=79 // pred_region
          %s1533 = sand.u32 %s212, 1
          %s1534 = scalar_lea.sflag [#allocation4], %s1533
          %s1535 = sand.u32 %s212, 1
          %s1536 = smul.addr %s1535, 16
          %s1537 = scalar_lea.vmem [#allocation13], %s1536
          %1538 = dma.done %s1534, 256
        $region84: #{tpu_custom_call.1} parent=79 // pred_fallthru
          _
        // Predicated region
        $region85: #{tpu_custom_call.1} parent=79 // pred_check
          %p1539 = pneg %p255
        $region86: #{tpu_custom_call.1} parent=79 // pred_check_branch
          %1541 = sbr.rel (%p1539) target = $region88
        $region87: #{tpu_custom_call.1} parent=79 // pred_region
          %s1542 = sand.u32 %s240, 1
          %s1543 = scalar_lea.sflag [#allocation15], %s1542
          %s1544 = sand.u32 %s240, 1
          %s1545 = smul.addr %s1544, 2
          %s1546 = scalar_lea.vmem [#allocation14], %s1545
          %1547 = dma.done %s1543, 32
        $region88: #{tpu_custom_call.1} parent=79 // pred_fallthru
          _
      $region80: #{tpu_custom_call.1} parent=5 // pred_fallthru
        _
    $region6: #{tpu_custom_call.1} parent=1 // loop_footer
      %s34 = sadd.s32 1, %s30
    $region7: #{tpu_custom_call.1} parent=1 // loop_footer_branch
      %29 = sbr.rel target = $region3
    $region8: #{tpu_custom_call.1} parent=1 // loop_exit
      _
    %1548 = vsyncpa [#allocation3], 1
    %s1549 = scalar_lea.sflag [#allocation3], 1
    %1550 = vsyncpa %s1549, 1
    %1551 = vsyncpa [#allocation6], 1
    %s1552 = scalar_lea.sflag [#allocation6], 1
    %1553 = vsyncpa %s1552, 1
    %1554 = vsyncpa [#allocation9], 1
    %s1555 = scalar_lea.sflag [#allocation9], 1
    %1556 = vsyncpa %s1555, 1
    %1557 = vsyncpa [#allocation12], 1
    %1558 = vsyncpa [#allocation4], 1
    %s1559 = scalar_lea.sflag [#allocation4], 1
    %1560 = vsyncpa %s1559, 1
    %1561 = vsyncpa [#allocation15], 1
    %s1562 = scalar_lea.sflag [#allocation15], 1
    %1563 = vsyncpa %s1562, 1

</llo_original>
